<compile_context>
chip_gen: v7x
topology: tpu7x:2x2x1
jax: 0.10.0
libtpu: 0.0.40
codegen_flags: <defaults>
</compile_context>

<pallas_src>
import jax
import jax.numpy as jnp
from jax import lax
from jax.experimental import pallas as pl
from jax.experimental.pallas import tpu as pltpu

L = 500            # feature dim fixed by the module (self.L)
LP = 512           # L padded to a lane multiple
HID = 128          # q() hidden / output dim
NUM_CLASSES = 3    # default num_classes
CP = 8             # classes padded to one sublane group
NEG = -1e30        # additive mask for padded bag rows (finite -> no inf-inf NaNs)
INV_SQRT_HID = 0.08838834764831845   # 1 / sqrt(128), Python constant


def _round_up(x, m):
    return ((x + m - 1) // m) * m


def _cdiv(a, b):
    return -(-a // b)


def bclassifier_kernel(n_ref, feats_ref, mfeat_ref, w1_ref, b1_ref, w2_ref, b2_ref,
                       scores_ref, bp_ref, mp_ref, lp_ref, qmax_ref):
    """Grid = (num_cores [parallel], steps_per_core [arbitrary]).

    Per-core resident state (outputs with index maps depending only on the core
    axis): mp (CP,1) running max, lp (CP,1) running denom, bp (CP,LP)
    unnormalized B accumulator.  Merged across cores in the XLA epilogue.
    """
    core = pl.program_id(0)
    step = pl.program_id(1)
    steps = pl.num_programs(1)
    tn = feats_ref.shape[0]

    w1 = w1_ref[...]                      # (LP, HID)  bf16
    w2 = w2_ref[...]                      # (HID, HID) bf16
    b1 = b1_ref[...]                      # (1, HID)   f32
    b2 = b2_ref[...]                      # (1, HID)   f32

    @pl.when(step == 0)
    def _init():
        # q_max = q(m_feats), with the 1/sqrt(128) softmax scale folded in.
        # Recomputed once per core (tiny: (8,512)x(512,128)).
        hq = jnp.maximum(
            jnp.dot(mfeat_ref[...], w1, preferred_element_type=jnp.float32) + b1, 0.0)
        qm = jnp.tanh(
            jnp.dot(hq.astype(jnp.bfloat16), w2,
                    preferred_element_type=jnp.float32) + b2)
        qmax_ref[...] = qm * INV_SQRT_HID
        mp_ref[...] = jnp.full(mp_ref.shape, NEG, dtype=mp_ref.dtype)
        lp_ref[...] = jnp.zeros(lp_ref.shape, dtype=lp_ref.dtype)
        bp_ref[...] = jnp.zeros(bp_ref.shape, dtype=bp_ref.dtype)

    # ---- Q tile = tanh(relu(feats @ W1 + b1) @ W2 + b2) : (tn, HID) ----
    feats_t = feats_ref[...]              # (tn, LP) bf16, streamed
    h = jnp.maximum(
        jnp.dot(feats_t, w1, preferred_element_type=jnp.float32) + b1, 0.0)
    q_t = jnp.tanh(
        jnp.dot(h.astype(jnp.bfloat16), w2,
                preferred_element_type=jnp.float32) + b2)

    # ---- scaled scores, classes on sublanes, bag rows on lanes: (CP, tn) ----
    s = lax.dot_general(qmax_ref[...].astype(jnp.bfloat16),
                        q_t.astype(jnp.bfloat16),
                        (((1,), (1,)), ((), ())),
                        preferred_element_type=jnp.float32)

    # in-kernel valid-row mask (n is scalar-prefetched into SMEM)
    g = core * steps + step                                   # global block idx
    col = lax.broadcasted_iota(jnp.int32, (1, tn), 1) + g * tn
    s = jnp.where(col < n_ref[0], s, NEG)

    scores_ref[...] = s                   # lane-dense (CP, tn) store

    # ---- per-core online softmax over N + unnormalized B accumulation ----
    m_old = mp_ref[...]                                            # (CP, 1)
    m_new = jnp.maximum(m_old, jnp.max(s, axis=1, keepdims=True))
    alpha = jnp.exp(m_old - m_new)
    p = jnp.exp(s - m_new)                                         # (CP, tn)
    lp_ref[...] = alpha * lp_ref[...] + jnp.sum(p, axis=1, keepdims=True)
    bp_ref[...] = alpha * bp_ref[...] + lax.dot_general(
        p.astype(jnp.bfloat16), feats_t,
        (((1,), (0,)), ((), ())), preferred_element_type=jnp.float32)
    mp_ref[...] = m_new


def bclassifier_forward(feats, c, params, tile_n=2048, num_cores=2):
    n, l_in = feats.shape
    assert l_in == L and n >= 1
    nc = params["wf"].shape[0]
    f32, bf16 = jnp.float32, jnp.bfloat16

    # ---- hoisted top-1 selection (matches torch.sort(c,0,desc)[1][0] up to ties) ----
    idx = jnp.argmax(c, axis=0)                      # (C,)
    m_feats = feats[idx]                             # (C, L)

    # ---- tiling over the bag dimension: pick block count first, pad N to 128s ----
    max_tn = _round_up(max(tile_n, 128), 128)
    k = _round_up(max(num_cores, _cdiv(n, max_tn)), num_cores)  # total blocks
    tn = _round_up(_cdiv(n, k), 128)                 # <= max_tn, multiple of 128
    n_pad = k * tn                                   # < n + 128*k wasted rows
    steps = k // num_cores

    feats_p = jnp.zeros((n_pad, LP), bf16).at[:n, :L].set(feats.astype(bf16))
    mfeat_p = jnp.zeros((CP, LP), bf16).at[:nc, :L].set(m_feats.astype(bf16))
    w1_p = jnp.zeros((LP, HID), bf16).at[:L, :].set(params["w1"].astype(bf16))
    w2_p = params["w2"].astype(bf16)
    b1 = params["b1"].astype(f32).reshape(1, HID)
    b2 = params["b2"].astype(f32).reshape(1, HID)
    n_arr = jnp.array([n], jnp.int32)                # scalar-prefetched bag length

    out_shapes = (
        jax.ShapeDtypeStruct((CP, n_pad), f32),           # scaled, masked scores
        jax.ShapeDtypeStruct((num_cores, CP, LP), f32),   # per-core unnormalized B
        jax.ShapeDtypeStruct((num_cores, CP, 1), f32),    # per-core running max
        jax.ShapeDtypeStruct((num_cores, CP, 1), f32),    # per-core denom
    )
    grid_spec = pltpu.PrefetchScalarGridSpec(
        num_scalar_prefetch=1,
        grid=(num_cores, steps),
        in_specs=[
            pl.BlockSpec((tn, LP), lambda ci, si, n_r: (ci * steps + si, 0)),   # feats
            pl.BlockSpec((CP, LP), lambda ci, si, n_r: (0, 0)),                 # m_feats
            pl.BlockSpec((LP, HID), lambda ci, si, n_r: (0, 0)),                # W1
            pl.BlockSpec((1, HID), lambda ci, si, n_r: (0, 0)),                 # b1
            pl.BlockSpec((HID, HID), lambda ci, si, n_r: (0, 0)),               # W2
            pl.BlockSpec((1, HID), lambda ci, si, n_r: (0, 0)),                 # b2
        ],
        out_specs=[
            pl.BlockSpec((CP, tn), lambda ci, si, n_r: (0, ci * steps + si)),   # scores
            pl.BlockSpec((None, CP, LP), lambda ci, si, n_r: (ci, 0, 0)),       # B partial
            pl.BlockSpec((None, CP, 1), lambda ci, si, n_r: (ci, 0, 0)),        # m partial
            pl.BlockSpec((None, CP, 1), lambda ci, si, n_r: (ci, 0, 0)),        # l partial
        ],
        scratch_shapes=[pltpu.VMEM((CP, HID), jnp.float32)],   # pre-scaled q_max
    )
    scores, b_part, m_part, l_part = pl.pallas_call(
        bclassifier_kernel,
        out_shape=out_shapes,
        grid_spec=grid_spec,
        compiler_params=pltpu.CompilerParams(
            # core axis sharded across v7x's two TensorCores; N axis carries the
            # online-softmax reduction.
            dimension_semantics=("parallel", "arbitrary"),
            vmem_limit_bytes=32 * 1024 * 1024),
    )(n_arr, feats_p, mfeat_p, w1_p, b1, w2_p, b2)

    # ---- XLA epilogue: merge per-core partials (log-sum-exp), build A/B/Cout ----
    m_p = m_part[:, :nc, :]                          # (cores, C, 1)
    l_p = l_part[:, :nc, :]
    b_p = b_part[:, :nc, :L]                         # (cores, C, L)
    m_tot = jnp.max(m_p, axis=0)                     # (C, 1)
    scale = jnp.exp(m_p - m_tot)                     # (cores, C, 1); 0 for empty cores
    l_tot = jnp.sum(l_p * scale, axis=0)             # (C, 1)
    B2d = jnp.sum(b_p * scale, axis=0) / l_tot       # (C, L), exact divide

    sc = scores[:nc, :n]                             # (C, N) scaled masked logits
    A = (jnp.exp(sc - m_tot) / l_tot).T              # (N, C)

    wf = params["wf"].astype(f32)                    # (C, C, L) Conv1d weight
    bfc = params["bf"].astype(f32).reshape(nc)       # (C,)     Conv1d bias
    C_out = (jnp.einsum("oil,il->o", wf, B2d) + bfc).reshape(1, nc)
    B = B2d.reshape(1, nc, L)                        # match torch's (1, C, L)
    return C_out, A, B


def reference_forward(feats, c, p):
    h = jnp.maximum(feats @ p["w1"] + p["b1"], 0.0)
    Q = jnp.tanh(h @ p["w2"] + p["b2"])
    idx = jnp.argmax(c, axis=0)
    m_feats = feats[idx]
    hm = jnp.maximum(m_feats @ p["w1"] + p["b1"], 0.0)
    q_max = jnp.tanh(hm @ p["w2"] + p["b2"])
    A = jax.nn.softmax((Q @ q_max.T) / jnp.sqrt(jnp.float32(HID)), axis=0)
    B = A.T @ feats
    Cout = jnp.einsum("oil,il->o", p["wf"], B) + p["bf"][:, 0]
    return Cout.reshape(1, -1), A, B.reshape(1, *B.shape)


if __name__ == "__main__":
    N = 600  # bag size: exercises 2 parallel cores x 3 streamed steps at tile_n=128
    key = jax.random.PRNGKey(0)
    k = jax.random.split(key, 8)

    # deterministic synthetic parameters (shapes from BClassifier.__init__)
    params = {
        "w1": jax.random.normal(k[0], (L, HID), jnp.float32) * 0.05,        # Linear(500,128).weight.T
        "b1": jax.random.normal(k[1], (1, HID), jnp.float32) * 0.05,
        "w2": jax.random.normal(k[2], (HID, HID), jnp.float32) * 0.05,      # Linear(128,128).weight.T
        "b2": jax.random.normal(k[3], (1, HID), jnp.float32) * 0.05,
        "wf": jax.random.normal(k[4], (NUM_CLASSES, NUM_CLASSES, L), jnp.float32) * 0.05,  # Conv1d weight
        "bf": jax.random.normal(k[5], (NUM_CLASSES, 1), jnp.float32) * 0.05,               # Conv1d bias
    }
    feats = jax.random.normal(k[6], (N, L), jnp.float32)
    c = jax.random.normal(k[7], (N, NUM_CLASSES), jnp.float32)

    C_ref, A_ref, B_ref = reference_forward(feats, c, params)

    # small tile: multi-step online softmax + cross-core merge path
    for tile in (128, 2048):
        C_out, A, B = bclassifier_forward(feats, c, params, tile_n=tile)
        jax.block_until_ready((C_out, A, B))
        assert C_out.shape == (1, NUM_CLASSES)
        assert A.shape == (N, NUM_CLASSES)
        assert B.shape == (1, NUM_CLASSES, L)
        # bf16 MXU inputs with f32 accumulation -> tolerances loosened vs. pure f32.
        assert jnp.allclose(A, A_ref, atol=5e-3, rtol=5e-2), f"A mismatch (tile_n={tile})"
        assert jnp.allclose(B, B_ref, atol=2e-2, rtol=2e-2), f"B mismatch (tile_n={tile})"
        assert jnp.allclose(C_out, C_ref, atol=5e-2, rtol=5e-2), f"C mismatch (tile_n={tile})"

    print("KERNEL_OK")
</pallas_src>

<mosaic_0001>
module attributes {stable_mosaic.version = 11 : i64} {
  func.func @bclassifier_kernel(%arg0: i32, %arg1: i32, %arg2: memref<1xi32, #tpu.memory_space<smem>>, %arg3: memref<128x512xbf16, #tpu.memory_space<vmem>>, %arg4: memref<8x512xbf16, #tpu.memory_space<vmem>>, %arg5: memref<512x128xbf16, #tpu.memory_space<vmem>>, %arg6: memref<1x128xf32, #tpu.memory_space<vmem>>, %arg7: memref<128x128xbf16, #tpu.memory_space<vmem>>, %arg8: memref<1x128xf32, #tpu.memory_space<vmem>>, %arg9: memref<8x128xf32, #tpu.memory_space<vmem>>, %arg10: memref<1x8x512xf32, #tpu.memory_space<vmem>>, %arg11: memref<1x8x1xf32, #tpu.memory_space<vmem>>, %arg12: memref<1x8x1xf32, #tpu.memory_space<vmem>>, %arg13: memref<8x128xf32, #tpu.memory_space<vmem>>) attributes {dimension_semantics = [#tpu.dimension_semantics<parallel>, #tpu.dimension_semantics<arbitrary>], iteration_bounds = array<i64: 2, 3>, scalar_prefetch = 1 : i64, scratch_operands = 1 : i64, tpu.core_type = #tpu.core_type<tc>, window_params = [{transform_indices = @transform_0, window_bounds = array<i64: 128, 512>}, {pipeline_mode = #tpu.pipeline_mode<synchronous>, transform_indices = @transform_1, window_bounds = array<i64: 8, 512>}, {pipeline_mode = #tpu.pipeline_mode<synchronous>, transform_indices = @transform_2, window_bounds = array<i64: 512, 128>}, {pipeline_mode = #tpu.pipeline_mode<synchronous>, transform_indices = @transform_3, window_bounds = array<i64: 1, 128>}, {pipeline_mode = #tpu.pipeline_mode<synchronous>, transform_indices = @transform_4, window_bounds = array<i64: 128, 128>}, {pipeline_mode = #tpu.pipeline_mode<synchronous>, transform_indices = @transform_5, window_bounds = array<i64: 1, 128>}, {transform_indices = @transform_6, window_bounds = array<i64: 8, 128>}, {transform_indices = @transform_7, window_bounds = array<i64: 1, 8, 512>}, {transform_indices = @transform_8, window_bounds = array<i64: 1, 8, 1>}, {transform_indices = @transform_9, window_bounds = array<i64: 1, 8, 1>}]} {
    %c0 = arith.constant 0 : index
    %c0_0 = arith.constant 0 : index
    %0 = vector.load %arg5[%c0, %c0_0] : memref<512x128xbf16, #tpu.memory_space<vmem>>, vector<512x128xbf16>
    %c0_1 = arith.constant 0 : index
    %c0_2 = arith.constant 0 : index
    %1 = vector.load %arg7[%c0_1, %c0_2] : memref<128x128xbf16, #tpu.memory_space<vmem>>, vector<128x128xbf16>
    %c0_3 = arith.constant 0 : index
    %c0_4 = arith.constant 0 : index
    %2 = vector.load %arg6[%c0_3, %c0_4] : memref<1x128xf32, #tpu.memory_space<vmem>>, vector<1x128xf32>
    %c0_5 = arith.constant 0 : index
    %c0_6 = arith.constant 0 : index
    %3 = vector.load %arg8[%c0_5, %c0_6] : memref<1x128xf32, #tpu.memory_space<vmem>>, vector<1x128xf32>
    %c0_i32 = arith.constant 0 : i32
    %4 = arith.cmpi eq, %arg1, %c0_i32 : i32
    %5 = arith.extui %4 : i1 to i32
    %c0_i32_7 = arith.constant 0 : i32
    %6 = arith.cmpi ne, %5, %c0_i32_7 : i32
    scf.if %6 {
      %c0_40 = arith.constant 0 : index
      %c0_41 = arith.constant 0 : index
      %68 = vector.load %arg4[%c0_40, %c0_41] : memref<8x512xbf16, #tpu.memory_space<vmem>>, vector<8x512xbf16>
      %cst_42 = arith.constant dense<0.000000e+00> : vector<8x128xf32>
      %69 = tpu.matmul %68, %0, %cst_42 {dimension_numbers = #tpu.dot_dimension_numbers<[1], [0], [0], [1], [0, 0, 1, 1], [], []>} : vector<8x512xbf16>, vector<512x128xbf16>, vector<8x128xf32> -> vector<8x128xf32>
      %70 = vector.broadcast %2 : vector<1x128xf32> to vector<8x128xf32>
      %71 = arith.addf %69, %70 : vector<8x128xf32>
      %cst_43 = arith.constant 0.000000e+00 : f32
      %72 = vector.broadcast %cst_43 : f32 to vector<8x128xf32>
      %73 = arith.maximumf %71, %72 : vector<8x128xf32>
      %74 = arith.truncf %73 : vector<8x128xf32> to vector<8x128xbf16>
      %cst_44 = arith.constant dense<0.000000e+00> : vector<8x128xf32>
      %75 = tpu.matmul %74, %1, %cst_44 {dimension_numbers = #tpu.dot_dimension_numbers<[1], [0], [0], [1], [0, 0, 1, 1], [], []>} : vector<8x128xbf16>, vector<128x128xbf16>, vector<8x128xf32> -> vector<8x128xf32>
      %76 = vector.broadcast %3 : vector<1x128xf32> to vector<8x128xf32>
      %77 = arith.addf %75, %76 : vector<8x128xf32>
      %78 = math.tanh %77 : vector<8x128xf32>
      %cst_45 = arith.constant 0.0883883461 : f32
      %79 = vector.broadcast %cst_45 : f32 to vector<8x128xf32>
      %80 = arith.mulf %78, %79 : vector<8x128xf32>
      %c0_46 = arith.constant 0 : index
      %c0_47 = arith.constant 0 : index
      %81 = vector.load %arg13[%c0_46, %c0_47] : memref<8x128xf32, #tpu.memory_space<vmem>>, vector<8x128xf32>
      tpu.vector_store %arg13[%c0_46, %c0_47], %80 {strides = array<i32>} : memref<8x128xf32, #tpu.memory_space<vmem>>, vector<8x128xf32>,
      %cst_48 = arith.constant -1.000000e+30 : f32
      %82 = vector.broadcast %cst_48 : f32 to vector<8x1xf32>
      %c0_49 = arith.constant 0 : index
      %c0_50 = arith.constant 0 : index
      %c0_51 = arith.constant 0 : index
      %83 = vector.load %arg11[%c0_49, %c0_50, %c0_51] : memref<1x8x1xf32, #tpu.memory_space<vmem>>, vector<1x8x1xf32>
      %84 = vector.shape_cast %83 : vector<1x8x1xf32> to vector<8x1xf32>
      %85 = vector.shape_cast %82 : vector<8x1xf32> to vector<1x8x1xf32>
      tpu.vector_store %arg11[%c0_49, %c0_50, %c0_51], %85 {strides = array<i32>} : memref<1x8x1xf32, #tpu.memory_space<vmem>>, vector<1x8x1xf32>,
      %cst_52 = arith.constant 0.000000e+00 : f32
      %86 = vector.broadcast %cst_52 : f32 to vector<8x1xf32>
      %c0_53 = arith.constant 0 : index
      %c0_54 = arith.constant 0 : index
      %c0_55 = arith.constant 0 : index
      %87 = vector.load %arg12[%c0_53, %c0_54, %c0_55] : memref<1x8x1xf32, #tpu.memory_space<vmem>>, vector<1x8x1xf32>
      %88 = vector.shape_cast %87 : vector<1x8x1xf32> to vector<8x1xf32>
      %89 = vector.shape_cast %86 : vector<8x1xf32> to vector<1x8x1xf32>
      tpu.vector_store %arg12[%c0_53, %c0_54, %c0_55], %89 {strides = array<i32>} : memref<1x8x1xf32, #tpu.memory_space<vmem>>, vector<1x8x1xf32>,
      %cst_56 = arith.constant 0.000000e+00 : f32
      %90 = vector.broadcast %cst_56 : f32 to vector<8x512xf32>
      %c0_57 = arith.constant 0 : index
      %c0_58 = arith.constant 0 : index
      %c0_59 = arith.constant 0 : index
      %91 = vector.load %arg10[%c0_57, %c0_58, %c0_59] : memref<1x8x512xf32, #tpu.memory_space<vmem>>, vector<1x8x512xf32>
      %92 = vector.shape_cast %91 : vector<1x8x512xf32> to vector<8x512xf32>
      %93 = vector.shape_cast %90 : vector<8x512xf32> to vector<1x8x512xf32>
      tpu.vector_store %arg10[%c0_57, %c0_58, %c0_59], %93 {strides = array<i32>} : memref<1x8x512xf32, #tpu.memory_space<vmem>>, vector<1x8x512xf32>,
    } else {
    }
    %c0_8 = arith.constant 0 : index
    %c0_9 = arith.constant 0 : index
    %7 = vector.load %arg3[%c0_8, %c0_9] : memref<128x512xbf16, #tpu.memory_space<vmem>>, vector<128x512xbf16>
    %cst = arith.constant dense<0.000000e+00> : vector<128x128xf32>
    %8 = tpu.matmul %7, %0, %cst {dimension_numbers = #tpu.dot_dimension_numbers<[1], [0], [0], [1], [0, 0, 1, 1], [], []>} : vector<128x512xbf16>, vector<512x128xbf16>, vector<128x128xf32> -> vector<128x128xf32>
    %9 = vector.broadcast %2 : vector<1x128xf32> to vector<128x128xf32>
    %10 = arith.addf %8, %9 : vector<128x128xf32>
    %cst_10 = arith.constant 0.000000e+00 : f32
    %11 = vector.broadcast %cst_10 : f32 to vector<128x128xf32>
    %12 = arith.maximumf %10, %11 : vector<128x128xf32>
    %13 = arith.truncf %12 : vector<128x128xf32> to vector<128x128xbf16>
    %cst_11 = arith.constant dense<0.000000e+00> : vector<128x128xf32>
    %14 = tpu.matmul %13, %1, %cst_11 {dimension_numbers = #tpu.dot_dimension_numbers<[1], [0], [0], [1], [0, 0, 1, 1], [], []>} : vector<128x128xbf16>, vector<128x128xbf16>, vector<128x128xf32> -> vector<128x128xf32>
    %15 = vector.broadcast %3 : vector<1x128xf32> to vector<128x128xf32>
    %16 = arith.addf %14, %15 : vector<128x128xf32>
    %17 = math.tanh %16 : vector<128x128xf32>
    %c0_12 = arith.constant 0 : index
    %c0_13 = arith.constant 0 : index
    %18 = vector.load %arg13[%c0_12, %c0_13] : memref<8x128xf32, #tpu.memory_space<vmem>>, vector<8x128xf32>
    %19 = arith.truncf %18 : vector<8x128xf32> to vector<8x128xbf16>
    %20 = arith.truncf %17 : vector<128x128xf32> to vector<128x128xbf16>
    %cst_14 = arith.constant dense<0.000000e+00> : vector<8x128xf32>
    %21 = tpu.matmul %19, %20, %cst_14 {dimension_numbers = #tpu.dot_dimension_numbers<[1], [1], [0], [0], [0, 0, 1, 0], [], []>} : vector<8x128xbf16>, vector<128x128xbf16>, vector<8x128xf32> -> vector<8x128xf32>
    %c3_i32 = arith.constant 3 : i32
    %22 = arith.muli %arg0, %c3_i32 : i32
    %23 = arith.addi %22, %arg1 : i32
    %24 = tpu.iota {dimensions = array<i32: 1>} : vector<1x128xi32>
    %c128_i32 = arith.constant 128 : i32
    %25 = arith.muli %23, %c128_i32 : i32
    %26 = vector.broadcast %25 : i32 to vector<1x128xi32>
    %27 = arith.addi %24, %26 : vector<1x128xi32>
    %c0_15 = arith.constant 0 : index
    %28 = memref.load %arg2[%c0_15] : memref<1xi32, #tpu.memory_space<smem>>
    %29 = vector.broadcast %28 : i32 to vector<1x128xi32>
    %30 = arith.cmpi slt, %27, %29 : vector<1x128xi32>
    %cst_16 = arith.constant -1.000000e+30 : f32
    %31 = vector.shape_cast %30 : vector<1x128xi1> to vector<1x128xi1>
    %32 = vector.broadcast %31 : vector<1x128xi1> to vector<8x128xi1>
    %33 = vector.broadcast %cst_16 : f32 to vector<8x128xf32>
    %34 = arith.select %32, %21, %33 : vector<8x128xi1>, vector<8x128xf32>
    %c0_17 = arith.constant 0 : index
    %c0_18 = arith.constant 0 : index
    %35 = vector.load %arg9[%c0_17, %c0_18] : memref<8x128xf32, #tpu.memory_space<vmem>>, vector<8x128xf32>
    tpu.vector_store %arg9[%c0_17, %c0_18], %34 {strides = array<i32>} : memref<8x128xf32, #tpu.memory_space<vmem>>, vector<8x128xf32>,
    %c0_19 = arith.constant 0 : index
    %c0_20 = arith.constant 0 : index
    %c0_21 = arith.constant 0 : index
    %36 = vector.load %arg11[%c0_19, %c0_20, %c0_21] : memref<1x8x1xf32, #tpu.memory_space<vmem>>, vector<1x8x1xf32>
    %37 = vector.shape_cast %36 : vector<1x8x1xf32> to vector<8x1xf32>
    %cst_22 = arith.constant dense<0xFF800000> : vector<8xf32>
    %38 = vector.multi_reduction <maximumf>, %34, %cst_22 [1] : vector<8x128xf32> to vector<8xf32>
    %39 = vector.shape_cast %38 : vector<8xf32> to vector<8x1xf32>
    %40 = arith.maximumf %37, %39 : vector<8x1xf32>
    %41 = arith.subf %37, %40 : vector<8x1xf32>
    %42 = math.exp %41 : vector<8x1xf32>
    %43 = vector.broadcast %40 : vector<8x1xf32> to vector<8x128xf32>
    %44 = arith.subf %34, %43 : vector<8x128xf32>
    %45 = math.exp %44 : vector<8x128xf32>
    %c0_23 = arith.constant 0 : index
    %c0_24 = arith.constant 0 : index
    %c0_25 = arith.constant 0 : index
    %46 = vector.load %arg12[%c0_23, %c0_24, %c0_25] : memref<1x8x1xf32, #tpu.memory_space<vmem>>, vector<1x8x1xf32>
    %47 = vector.shape_cast %46 : vector<1x8x1xf32> to vector<8x1xf32>
    %48 = arith.mulf %42, %47 : vector<8x1xf32>
    %cst_26 = arith.constant dense<0.000000e+00> : vector<8xf32>
    %49 = vector.multi_reduction <add>, %45, %cst_26 [1] : vector<8x128xf32> to vector<8xf32>
    %50 = vector.shape_cast %49 : vector<8xf32> to vector<8x1xf32>
    %51 = arith.addf %48, %50 : vector<8x1xf32>
    %c0_27 = arith.constant 0 : index
    %c0_28 = arith.constant 0 : index
    %c0_29 = arith.constant 0 : index
    %52 = vector.load %arg12[%c0_27, %c0_28, %c0_29] : memref<1x8x1xf32, #tpu.memory_space<vmem>>, vector<1x8x1xf32>
    %53 = vector.shape_cast %52 : vector<1x8x1xf32> to vector<8x1xf32>
    %54 = vector.shape_cast %51 : vector<8x1xf32> to vector<1x8x1xf32>
    tpu.vector_store %arg12[%c0_27, %c0_28, %c0_29], %54 {strides = array<i32>} : memref<1x8x1xf32, #tpu.memory_space<vmem>>, vector<1x8x1xf32>,
    %c0_30 = arith.constant 0 : index
    %c0_31 = arith.constant 0 : index
    %c0_32 = arith.constant 0 : index
    %55 = vector.load %arg10[%c0_30, %c0_31, %c0_32] : memref<1x8x512xf32, #tpu.memory_space<vmem>>, vector<1x8x512xf32>
    %56 = vector.shape_cast %55 : vector<1x8x512xf32> to vector<8x512xf32>
    %57 = vector.broadcast %42 : vector<8x1xf32> to vector<8x512xf32>
    %58 = arith.mulf %57, %56 : vector<8x512xf32>
    %59 = arith.truncf %45 : vector<8x128xf32> to vector<8x128xbf16>
    %cst_33 = arith.constant dense<0.000000e+00> : vector<8x512xf32>
    %60 = tpu.matmul %59, %7, %cst_33 {dimension_numbers = #tpu.dot_dimension_numbers<[1], [0], [0], [1], [0, 0, 1, 1], [], []>} : vector<8x128xbf16>, vector<128x512xbf16>, vector<8x512xf32> -> vector<8x512xf32>
    %61 = arith.addf %58, %60 : vector<8x512xf32>
    %c0_34 = arith.constant 0 : index
    %c0_35 = arith.constant 0 : index
    %c0_36 = arith.constant 0 : index
    %62 = vector.load %arg10[%c0_34, %c0_35, %c0_36] : memref<1x8x512xf32, #tpu.memory_space<vmem>>, vector<1x8x512xf32>
    %63 = vector.shape_cast %62 : vector<1x8x512xf32> to vector<8x512xf32>
    %64 = vector.shape_cast %61 : vector<8x512xf32> to vector<1x8x512xf32>
    tpu.vector_store %arg10[%c0_34, %c0_35, %c0_36], %64 {strides = array<i32>} : memref<1x8x512xf32, #tpu.memory_space<vmem>>, vector<1x8x512xf32>,
    %c0_37 = arith.constant 0 : index
    %c0_38 = arith.constant 0 : index
    %c0_39 = arith.constant 0 : index
    %65 = vector.load %arg11[%c0_37, %c0_38, %c0_39] : memref<1x8x1xf32, #tpu.memory_space<vmem>>, vector<1x8x1xf32>
    %66 = vector.shape_cast %65 : vector<1x8x1xf32> to vector<8x1xf32>
    %67 = vector.shape_cast %40 : vector<8x1xf32> to vector<1x8x1xf32>
    tpu.vector_store %arg11[%c0_37, %c0_38, %c0_39], %67 {strides = array<i32>} : memref<1x8x1xf32, #tpu.memory_space<vmem>>, vector<1x8x1xf32>,
    return
  }
  func.func @transform_0(%arg0: i32, %arg1: i32, %arg2: memref<1xi32, #tpu.memory_space<smem>>) -> (i32, i32) {
    %c3_i32 = arith.constant 3 : i32
    %0 = arith.muli %arg0, %c3_i32 : i32
    %1 = arith.addi %0, %arg1 : i32
    %c0_i32 = arith.constant 0 : i32
    %c0_i32_0 = arith.constant 0 : i32
    return %1, %c0_i32 : i32, i32
  }
  func.func @transform_1(%arg0: i32, %arg1: i32, %arg2: memref<1xi32, #tpu.memory_space<smem>>) -> (i32, i32) {
    %c0_i32 = arith.constant 0 : i32
    %c0_i32_0 = arith.constant 0 : i32
    %c0_i32_1 = arith.constant 0 : i32
    return %c0_i32, %c0_i32_0 : i32, i32
  }
  func.func @transform_2(%arg0: i32, %arg1: i32, %arg2: memref<1xi32, #tpu.memory_space<smem>>) -> (i32, i32) {
    %c0_i32 = arith.constant 0 : i32
    %c0_i32_0 = arith.constant 0 : i32
    %c0_i32_1 = arith.constant 0 : i32
    return %c0_i32, %c0_i32_0 : i32, i32
  }
  func.func @transform_3(%arg0: i32, %arg1: i32, %arg2: memref<1xi32, #tpu.memory_space<smem>>) -> (i32, i32) {
    %c0_i32 = arith.constant 0 : i32
    %c0_i32_0 = arith.constant 0 : i32
    %c0_i32_1 = arith.constant 0 : i32
    return %c0_i32, %c0_i32_0 : i32, i32
  }
  func.func @transform_4(%arg0: i32, %arg1: i32, %arg2: memref<1xi32, #tpu.memory_space<smem>>) -> (i32, i32) {
    %c0_i32 = arith.constant 0 : i32
    %c0_i32_0 = arith.constant 0 : i32
    %c0_i32_1 = arith.constant 0 : i32
    return %c0_i32, %c0_i32_0 : i32, i32
  }
  func.func @transform_5(%arg0: i32, %arg1: i32, %arg2: memref<1xi32, #tpu.memory_space<smem>>) -> (i32, i32) {
    %c0_i32 = arith.constant 0 : i32
    %c0_i32_0 = arith.constant 0 : i32
    %c0_i32_1 = arith.constant 0 : i32
    return %c0_i32, %c0_i32_0 : i32, i32
  }
  func.func @transform_6(%arg0: i32, %arg1: i32, %arg2: memref<1xi32, #tpu.memory_space<smem>>) -> (i32, i32) {
    %c3_i32 = arith.constant 3 : i32
    %0 = arith.muli %arg0, %c3_i32 : i32
    %1 = arith.addi %0, %arg1 : i32
    %c0_i32 = arith.constant 0 : i32
    %c0_i32_0 = arith.constant 0 : i32
    return %c0_i32, %1 : i32, i32
  }
  func.func @transform_7(%arg0: i32, %arg1: i32, %arg2: memref<1xi32, #tpu.memory_space<smem>>) -> (i32, i32, i32) {
    %c0_i32 = arith.constant 0 : i32
    %c0_i32_0 = arith.constant 0 : i32
    %c0_i32_1 = arith.constant 0 : i32
    return %arg0, %c0_i32, %c0_i32_0 : i32, i32, i32
  }
  func.func @transform_8(%arg0: i32, %arg1: i32, %arg2: memref<1xi32, #tpu.memory_space<smem>>) -> (i32, i32, i32) {
    %c0_i32 = arith.constant 0 : i32
    %c0_i32_0 = arith.constant 0 : i32
    %c0_i32_1 = arith.constant 0 : i32
    return %arg0, %c0_i32, %c0_i32_0 : i32, i32, i32
  }
  func.func @transform_9(%arg0: i32, %arg1: i32, %arg2: memref<1xi32, #tpu.memory_space<smem>>) -> (i32, i32, i32) {
    %c0_i32 = arith.constant 0 : i32
    %c0_i32_0 = arith.constant 0 : i32
    %c0_i32_1 = arith.constant 0 : i32
    return %arg0, %c0_i32, %c0_i32_0 : i32, i32, i32
  }
}

</mosaic_0001>

<llo_original>
// kernel: tpu_custom_call.1
$region0: #{tpu_custom_call.1}
  #allocation0 [shape = 'u32[]', space=smem, size = 0x4, offset = 0x4, fixed_abs, tag = 'smem constant byte address 0x4 - core index']
  #allocation1 [shape = 'u32[144,128]{1,0:T(1,128)}', space=vmem, size = 0x12000, scoped, tag = 'internal scratch']
  #allocation2 [shape = 'f32[8,128]{1,0:T(8,128)}', space=vmem, size = 0x1000, scoped, tag = 'scratch operand']
  #allocation3 [shape = 's32[1]{0}', space=sflag, size = 0x4, scoped, tag = 'scoped memory for tpu_custom_call.1']
  #allocation4 [shape = 's32[1]{0:T(128)S(6)}', space=smem, size = 0x200, scoped, tag = 'prefetched SMEM operand 0']
  %s0 = inlined_call_operand.<no memory space> [shape: s32[1], index: 0, kind: input, shape index: {}]
  %s1 = inlined_call_operand.hbm [shape: bf16[768,512], index: 1, kind: input, shape index: {}]
  %s2 = inlined_call_operand.hbm [shape: bf16[8,512], index: 2, kind: input, shape index: {}]
  %s3 = inlined_call_operand.hbm [shape: bf16[512,128], index: 3, kind: input, shape index: {}]
  %s4 = inlined_call_operand.vmem [shape: f32[1,128], index: 4, kind: input, shape index: {}]
  %s5 = inlined_call_operand.hbm [shape: bf16[128,128], index: 5, kind: input, shape index: {}]
  %s6 = inlined_call_operand.vmem [shape: f32[1,128], index: 6, kind: input, shape index: {}]
  %s7 = inlined_call_operand.hbm [shape: f32[8,768], index: 7, kind: output, shape index: {0}]
  %s8 = inlined_call_operand.hbm [shape: f32[2,8,512], index: 8, kind: output, shape index: {1}]
  %s9 = inlined_call_operand.vmem [shape: f32[2,8,1], index: 9, kind: output, shape index: {2}]
  %s10 = inlined_call_operand.vmem [shape: f32[2,8,1], index: 10, kind: output, shape index: {3}]
  %11 = xla_tuple %s7, %s8, %s9, %s10
  %s12 = sld [smem:[#allocation0]]
  $region101: #{tpu_custom_call.1} parent=0
    _
  %s14 = ssub.s32 1, %s12
  %s15 = scalar_select 0, %s14, %s12
  %16 = sst [smem:[#allocation4]] %s0
  $region1: #{tpu_custom_call.1} parent=0
    #allocation5 [shape = 'u8[262144]{0}', space=vmem, size = 0x40000, scoped, tag = 'input window, operand 1']
    #allocation6 [shape = 's32[2]{0}', space=sflag, size = 0x8, scoped, tag = 'scoped memory for tpu_custom_call.1']
    #allocation7 [shape = 's32[2]{0}', space=sflag, size = 0x8, scoped, tag = 'scoped memory for tpu_custom_call.1']
    #allocation8 [shape = 'u8[8192]{0}', space=vmem, size = 0x2000, scoped, tag = 'input window, operand 2, single buffered']
    #allocation9 [shape = 's32[1]{0}', space=sflag, size = 0x4, scoped, tag = 'scoped memory for tpu_custom_call.1']
    #allocation10 [shape = 'u8[131072]{0}', space=vmem, size = 0x20000, scoped, tag = 'input window, operand 3, single buffered']
    #allocation11 [shape = 'u8[32768]{0}', space=vmem, size = 0x8000, scoped, tag = 'input window, operand 5, single buffered']
    #allocation12 [shape = 's32[1]{0}', space=sflag, size = 0x4, scoped, tag = 'scoped memory for tpu_custom_call.1']
    #allocation13 [shape = 'u8[8192]{0}', space=vmem, size = 0x2000, scoped, tag = 'output window, operand 0']
    #allocation14 [shape = 'u8[32768]{0}', space=vmem, size = 0x8000, scoped, tag = 'output window, operand 1']
    #allocation15 [shape = 's32[2]{0}', space=sflag, size = 0x8, scoped, tag = 'scoped memory for tpu_custom_call.1']
    %17 = vsyncpa [#allocation6], 0
    %s18 = scalar_lea.sflag [#allocation6], 1
    %19 = vsyncpa %s18, 0
    %20 = vsyncpa [#allocation9], 0
    %21 = vsyncpa [#allocation12], 0
    %22 = vsyncpa [#allocation7], 0
    %s23 = scalar_lea.sflag [#allocation7], 1
    %24 = vsyncpa %s23, 0
    %25 = vsyncpa [#allocation15], 0
    %s26 = scalar_lea.sflag [#allocation15], 1
    %27 = vsyncpa %s26, 0
    loop: start=0, step=1, limit=8
    $region2: #{tpu_custom_call.1} parent=1 // loop_pre_header
      _
    $region3: #{tpu_custom_call.1} parent=1 // loop_header
      %s29 = sphi 0, %s33
      %p30 = scmp.ge.s32.totalorder %s29, 8
      %s36 = sphi 0, %s48
      %s37 = sphi 0, %s44
      %s38 = sphi 0, %s36
      %s39 = sphi 0, %s37
      %s40 = sphi 0, %s38
      %s41 = sphi 0, %s39
      %s55 = sphi 0, %s57
      %s58 = sphi 0, %s55
      %s59 = sphi 0, %s58
      %s75 = sphi 0, %s59
      %s79 = sphi 0, %s79
      %s81 = sphi 0, %s79
      %s82 = sphi 0, %s81
      %s96 = sphi 0, %s82
      %s100 = sphi 0, %s100
      %s102 = sphi 0, %s100
      %s103 = sphi 0, %s102
      %s117 = sphi 0, %s103
      %s121 = sphi 0, %s121
      %s123 = sphi 0, %s121
      %s124 = sphi 0, %s123
      %s138 = sphi 0, %s124
      %s142 = sphi 0, %s142
      %s144 = sphi 0, %s142
      %s145 = sphi 0, %s144
      %s159 = sphi 0, %s145
      %s163 = sphi 0, %s163
      %s165 = sphi 0, %s163
      %s166 = sphi 0, %s165
      %s180 = sphi 0, %s166
      %s190 = sphi 0, %s192
      %s193 = sphi 0, %s190
      %s194 = sphi 0, %s193
      %s210 = sphi 0, %s194
      %s216 = sphi 0, %s218
      %s219 = sphi 0, %s216
      %s220 = sphi 0, %s219
      %s236 = sphi 0, %s220
      %s242 = sphi 0, %s244
      %s245 = sphi 0, %s242
      %s246 = sphi 0, %s245
      %s262 = sphi 0, %s246
      %s268 = sphi 0, %s270
      %s271 = sphi 0, %s268
      %s272 = sphi 0, %s271
      %s288 = sphi 0, %s272
    $region4: #{tpu_custom_call.1} parent=1 // loop_header_branch
      %32 = sbr.rel (%p30) target = $region8
    $region5: #{tpu_custom_call.1} parent=1 // loop_body
      %s34 = ssub.s32 %s29, 1
      %s35 = ssub.s32 %s29, 2
      %s42 = sadd.s32 1, %s37
      %p43 = scmp.ge.s32.totalorder %s42, 3
      %s44 = scalar_select %p43, 0, %s42
      %s45 = sadd.s32 1, %s36
      %s46 = scalar_select %p43, %s45, %s36
      %p47 = scmp.ge.s32.totalorder %s46, 2
      %s48 = scalar_select %p47, 0, %s46
      %s49 = smul.u32 %s36, 3
      %s50 = sadd.s32 %s49, %s37
      %s51 = smul.u32 %s48, 3
      %s52 = sadd.s32 %s51, %s44
      %s53 = ssub.s32 %s50, %s52
      %p54 = scmp.eq.s32.totalorder %s53, 0
      %s56 = sadd.s32 %s55, 1
      %s57 = scalar_select %p54, %s55, %s56
      %p60 = pneg %p54
      %p61 = scmp.eq.s32.totalorder %s29, 5
      %p62 = por %p60, %p61
      %p63 = scmp.ne.s32.totalorder %s55, %s58
      %p64 = scmp.eq.s32.totalorder %s29, 0
      %p65 = por %p63, %p64
      %p66 = scmp.ne.s32.totalorder %s55, %s58
      %p67 = scmp.eq.s32.totalorder %s34, 5
      %p68 = por %p66, %p67
      %p69 = scmp.ne.s32.totalorder %s58, %s59
      %p70 = scmp.eq.s32.totalorder %s34, 0
      %p71 = por %p69, %p70
      %p72 = scmp.ne.s32.totalorder %s58, %s59
      %p73 = scmp.eq.s32.totalorder %s35, 5
      %p74 = por %p72, %p73
      %p76 = scmp.ne.s32.totalorder %s59, %s75
      %p77 = scmp.eq.s32.totalorder %s35, 0
      %p78 = por %p76, %p77
      %s80 = sadd.s32 %s79, 1
      %p83 = scmp.eq.s32.totalorder %s29, 5
      %p84 = scmp.ne.s32.totalorder %s79, %s81
      %p85 = scmp.eq.s32.totalorder %s29, 0
      %p86 = por %p84, %p85
      %p87 = scmp.ne.s32.totalorder %s79, %s81
      %p88 = scmp.eq.s32.totalorder %s34, 5
      %p89 = por %p87, %p88
      %p90 = scmp.ne.s32.totalorder %s81, %s82
      %p91 = scmp.eq.s32.totalorder %s34, 0
      %p92 = por %p90, %p91
      %p93 = scmp.ne.s32.totalorder %s81, %s82
      %p94 = scmp.eq.s32.totalorder %s35, 5
      %p95 = por %p93, %p94
      %p97 = scmp.ne.s32.totalorder %s82, %s96
      %p98 = scmp.eq.s32.totalorder %s35, 0
      %p99 = por %p97, %p98
      %s101 = sadd.s32 %s100, 1
      %p104 = scmp.eq.s32.totalorder %s29, 5
      %p105 = scmp.ne.s32.totalorder %s100, %s102
      %p106 = scmp.eq.s32.totalorder %s29, 0
      %p107 = por %p105, %p106
      %p108 = scmp.ne.s32.totalorder %s100, %s102
      %p109 = scmp.eq.s32.totalorder %s34, 5
      %p110 = por %p108, %p109
      %p111 = scmp.ne.s32.totalorder %s102, %s103
      %p112 = scmp.eq.s32.totalorder %s34, 0
      %p113 = por %p111, %p112
      %p114 = scmp.ne.s32.totalorder %s102, %s103
      %p115 = scmp.eq.s32.totalorder %s35, 5
      %p116 = por %p114, %p115
      %p118 = scmp.ne.s32.totalorder %s103, %s117
      %p119 = scmp.eq.s32.totalorder %s35, 0
      %p120 = por %p118, %p119
      %s122 = sadd.s32 %s121, 1
      %p125 = scmp.eq.s32.totalorder %s29, 5
      %p126 = scmp.ne.s32.totalorder %s121, %s123
      %p127 = scmp.eq.s32.totalorder %s29, 0
      %p128 = por %p126, %p127
      %p129 = scmp.ne.s32.totalorder %s121, %s123
      %p130 = scmp.eq.s32.totalorder %s34, 5
      %p131 = por %p129, %p130
      %p132 = scmp.ne.s32.totalorder %s123, %s124
      %p133 = scmp.eq.s32.totalorder %s34, 0
      %p134 = por %p132, %p133
      %p135 = scmp.ne.s32.totalorder %s123, %s124
      %p136 = scmp.eq.s32.totalorder %s35, 5
      %p137 = por %p135, %p136
      %p139 = scmp.ne.s32.totalorder %s124, %s138
      %p140 = scmp.eq.s32.totalorder %s35, 0
      %p141 = por %p139, %p140
      %s143 = sadd.s32 %s142, 1
      %p146 = scmp.eq.s32.totalorder %s29, 5
      %p147 = scmp.ne.s32.totalorder %s142, %s144
      %p148 = scmp.eq.s32.totalorder %s29, 0
      %p149 = por %p147, %p148
      %p150 = scmp.ne.s32.totalorder %s142, %s144
      %p151 = scmp.eq.s32.totalorder %s34, 5
      %p152 = por %p150, %p151
      %p153 = scmp.ne.s32.totalorder %s144, %s145
      %p154 = scmp.eq.s32.totalorder %s34, 0
      %p155 = por %p153, %p154
      %p156 = scmp.ne.s32.totalorder %s144, %s145
      %p157 = scmp.eq.s32.totalorder %s35, 5
      %p158 = por %p156, %p157
      %p160 = scmp.ne.s32.totalorder %s145, %s159
      %p161 = scmp.eq.s32.totalorder %s35, 0
      %p162 = por %p160, %p161
      %s164 = sadd.s32 %s163, 1
      %p167 = scmp.eq.s32.totalorder %s29, 5
      %p168 = scmp.ne.s32.totalorder %s163, %s165
      %p169 = scmp.eq.s32.totalorder %s29, 0
      %p170 = por %p168, %p169
      %p171 = scmp.ne.s32.totalorder %s163, %s165
      %p172 = scmp.eq.s32.totalorder %s34, 5
      %p173 = por %p171, %p172
      %p174 = scmp.ne.s32.totalorder %s165, %s166
      %p175 = scmp.eq.s32.totalorder %s34, 0
      %p176 = por %p174, %p175
      %p177 = scmp.ne.s32.totalorder %s165, %s166
      %p178 = scmp.eq.s32.totalorder %s35, 5
      %p179 = por %p177, %p178
      %p181 = scmp.ne.s32.totalorder %s166, %s180
      %p182 = scmp.eq.s32.totalorder %s35, 0
      %p183 = por %p181, %p182
      %s184 = smul.u32 %s36, 3
      %s185 = sadd.s32 %s184, %s37
      %s186 = smul.u32 %s48, 3
      %s187 = sadd.s32 %s186, %s44
      %s188 = ssub.s32 %s185, %s187
      %p189 = scmp.eq.s32.totalorder %s188, 0
      %s191 = sadd.s32 %s190, 1
      %s192 = scalar_select %p189, %s190, %s191
      %p195 = pneg %p189
      %p196 = scmp.eq.s32.totalorder %s29, 5
      %p197 = por %p195, %p196
      %p198 = scmp.ne.s32.totalorder %s190, %s193
      %p199 = scmp.eq.s32.totalorder %s29, 0
      %p200 = por %p198, %p199
      %p201 = scmp.ne.s32.totalorder %s190, %s193
      %p202 = scmp.eq.s32.totalorder %s34, 5
      %p203 = por %p201, %p202
      %p204 = scmp.ne.s32.totalorder %s193, %s194
      %p205 = scmp.eq.s32.totalorder %s34, 0
      %p206 = por %p204, %p205
      %p207 = scmp.ne.s32.totalorder %s193, %s194
      %p208 = scmp.eq.s32.totalorder %s35, 5
      %p209 = por %p207, %p208
      %p211 = scmp.ne.s32.totalorder %s194, %s210
      %p212 = scmp.eq.s32.totalorder %s35, 0
      %p213 = por %p211, %p212
      %s214 = ssub.s32 %s36, %s48
      %p215 = scmp.eq.s32.totalorder %s214, 0
      %s217 = sadd.s32 %s216, 1
      %s218 = scalar_select %p215, %s216, %s217
      %p221 = pneg %p215
      %p222 = scmp.eq.s32.totalorder %s29, 5
      %p223 = por %p221, %p222
      %p224 = scmp.ne.s32.totalorder %s216, %s219
      %p225 = scmp.eq.s32.totalorder %s29, 0
      %p226 = por %p224, %p225
      %p227 = scmp.ne.s32.totalorder %s216, %s219
      %p228 = scmp.eq.s32.totalorder %s34, 5
      %p229 = por %p227, %p228
      %p230 = scmp.ne.s32.totalorder %s219, %s220
      %p231 = scmp.eq.s32.totalorder %s34, 0
      %p232 = por %p230, %p231
      %p233 = scmp.ne.s32.totalorder %s219, %s220
      %p234 = scmp.eq.s32.totalorder %s35, 5
      %p235 = por %p233, %p234
      %p237 = scmp.ne.s32.totalorder %s220, %s236
      %p238 = scmp.eq.s32.totalorder %s35, 0
      %p239 = por %p237, %p238
      %s240 = ssub.s32 %s36, %s48
      %p241 = scmp.eq.s32.totalorder %s240, 0
      %s243 = sadd.s32 %s242, 1
      %s244 = scalar_select %p241, %s242, %s243
      %p247 = pneg %p241
      %p248 = scmp.eq.s32.totalorder %s29, 5
      %p249 = por %p247, %p248
      %p250 = scmp.ne.s32.totalorder %s242, %s245
      %p251 = scmp.eq.s32.totalorder %s29, 0
      %p252 = por %p250, %p251
      %p253 = scmp.ne.s32.totalorder %s242, %s245
      %p254 = scmp.eq.s32.totalorder %s34, 5
      %p255 = por %p253, %p254
      %p256 = scmp.ne.s32.totalorder %s245, %s246
      %p257 = scmp.eq.s32.totalorder %s34, 0
      %p258 = por %p256, %p257
      %p259 = scmp.ne.s32.totalorder %s245, %s246
      %p260 = scmp.eq.s32.totalorder %s35, 5
      %p261 = por %p259, %p260
      %p263 = scmp.ne.s32.totalorder %s246, %s262
      %p264 = scmp.eq.s32.totalorder %s35, 0
      %p265 = por %p263, %p264
      %s266 = ssub.s32 %s36, %s48
      %p267 = scmp.eq.s32.totalorder %s266, 0
      %s269 = sadd.s32 %s268, 1
      %s270 = scalar_select %p267, %s268, %s269
      %p273 = pneg %p267
      %p274 = scmp.eq.s32.totalorder %s29, 5
      %p275 = por %p273, %p274
      %p276 = scmp.ne.s32.totalorder %s268, %s271
      %p277 = scmp.eq.s32.totalorder %s29, 0
      %p278 = por %p276, %p277
      %p279 = scmp.ne.s32.totalorder %s268, %s271
      %p280 = scmp.eq.s32.totalorder %s34, 5
      %p281 = por %p279, %p280
      %p282 = scmp.ne.s32.totalorder %s271, %s272
      %p283 = scmp.eq.s32.totalorder %s34, 0
      %p284 = por %p282, %p283
      %p285 = scmp.ne.s32.totalorder %s271, %s272
      %p286 = scmp.eq.s32.totalorder %s35, 5
      %p287 = por %p285, %p286
      %p289 = scmp.ne.s32.totalorder %s272, %s288
      %p290 = scmp.eq.s32.totalorder %s35, 0
      %p291 = por %p289, %p290
      %p292 = scmp.le.s32.totalorder 1, %s29
      %p293 = scmp.lt.s32.totalorder %s29, 7
      %p294 = pnand %p292, %p293
      %p295 = pneg %p294
      // Predicated region
      $region9: #{tpu_custom_call.1} parent=5 // pred_check
        _
      $region10: #{tpu_custom_call.1} parent=5 // pred_check_branch
        %297 = sbr.rel (%p294) target = $region12
      $region11: #{tpu_custom_call.1} parent=5 // pred_region
        %s298 = ssub.s32 %s29, 1
        // Predicated region
        $region13: #{tpu_custom_call.1} parent=11 // pred_check
          %p299 = pneg %p92
        $region14: #{tpu_custom_call.1} parent=11 // pred_check_branch
          %301 = sbr.rel (%p299) target = $region16
        $region15: #{tpu_custom_call.1} parent=11 // pred_region
          %s303 = ssub.s32 256, 256
          %304 = vsyncadd [#allocation9], %s303
          %s306 = sshll.u32 [#allocation8], 4
          %s307 = int_to_ptr.vmem [resolvable:$true] %s306
          %309 = dma.hbm_to_vmem [thread:$0]  %s2, 256, %s307, [#allocation9]
        $region16: #{tpu_custom_call.1} parent=11 // pred_fallthru
          _
        // Predicated region
        $region17: #{tpu_custom_call.1} parent=11 // pred_check
          %p310 = pneg %p113
        $region18: #{tpu_custom_call.1} parent=11 // pred_check_branch
          %312 = sbr.rel (%p310) target = $region20
        $region19: #{tpu_custom_call.1} parent=11 // pred_region
          %s314 = ssub.s32 4096, 4096
          %315 = vsyncadd [#allocation9], %s314
          %s316 = sshll.u32 [#allocation10], 4
          %s317 = int_to_ptr.vmem [resolvable:$true] %s316
          %322 = dma.hbm_to_vmem [thread:$0]  %s3, 4096, %s317, [#allocation9], 64, 64, 4
        $region20: #{tpu_custom_call.1} parent=11 // pred_fallthru
          _
        // Predicated region
        $region21: #{tpu_custom_call.1} parent=11 // pred_check
          %p323 = pneg %p134
        $region22: #{tpu_custom_call.1} parent=11 // pred_check_branch
          %325 = sbr.rel (%p323) target = $region24
        $region23: #{tpu_custom_call.1} parent=11 // pred_region
          _
        $region24: #{tpu_custom_call.1} parent=11 // pred_fallthru
          _
        // Predicated region
        $region25: #{tpu_custom_call.1} parent=11 // pred_check
          %p326 = pneg %p155
        $region26: #{tpu_custom_call.1} parent=11 // pred_check_branch
          %328 = sbr.rel (%p326) target = $region28
        $region27: #{tpu_custom_call.1} parent=11 // pred_region
          %s330 = ssub.s32 1024, 1024
          %331 = vsyncadd [#allocation12], %s330
          %s332 = sshll.u32 [#allocation11], 4
          %s333 = int_to_ptr.vmem [resolvable:$true] %s332
          %338 = dma.hbm_to_vmem [thread:$0]  %s5, 1024, %s333, [#allocation12], 64, 64, 4
        $region28: #{tpu_custom_call.1} parent=11 // pred_fallthru
          _
        // Predicated region
        $region29: #{tpu_custom_call.1} parent=11 // pred_check
          %p339 = pneg %p176
        $region30: #{tpu_custom_call.1} parent=11 // pred_check_branch
          %341 = sbr.rel (%p339) target = $region32
        $region31: #{tpu_custom_call.1} parent=11 // pred_region
          _
        $region32: #{tpu_custom_call.1} parent=11 // pred_fallthru
          _
      $region12: #{tpu_custom_call.1} parent=5 // pred_fallthru
        _
      %p342 = scmp.lt.s32.totalorder %s29, 6
      // Predicated region
      $region33: #{tpu_custom_call.1} parent=5 // pred_check
        %p343 = pneg %p342
      $region34: #{tpu_custom_call.1} parent=5 // pred_check_branch
        %345 = sbr.rel (%p343) target = $region36
      $region35: #{tpu_custom_call.1} parent=5 // pred_region
        // Predicated region
        $region37: #{tpu_custom_call.1} parent=35 // pred_check
          %p346 = pneg %p65
        $region38: #{tpu_custom_call.1} parent=35 // pred_check_branch
          %348 = sbr.rel (%p346) target = $region40
        $region39: #{tpu_custom_call.1} parent=35 // pred_region
          %s349 = sand.u32 %s55, 1
          %s350 = scalar_lea.sflag [#allocation6], %s349
          %s351 = sand.u32 %s55, 1
          %s352 = smul.addr %s351, 256
          %s353 = scalar_lea.vmem [#allocation5], %s352
          %s354 = smul.u32 %s36, 3
          %s355 = sadd.s32 %s354, %s37
          %s356 = smul.u32 16, %s355
          %s358 = ssub.s32 4096, 4096
          %359 = vsyncadd %s350, %s358
          %s360 = smul.addr %s356, 4
          %s361 = smul.addr %s360, 64
          %s362 = scalar_lea.hbm %s1, %s361
          %s363 = sshll.u32 %s353, 4
          %s364 = int_to_ptr.vmem [resolvable:$true] %s363
          %369 = dma.hbm_to_vmem [thread:$0]  %s362, 4096, %s364, %s350, 256, 256, 16
        $region40: #{tpu_custom_call.1} parent=35 // pred_fallthru
          _
      $region36: #{tpu_custom_call.1} parent=5 // pred_fallthru
        _
      %p370 = scmp.le.s32.totalorder 1, %s29
      %p371 = scmp.lt.s32.totalorder %s29, 7
      %p372 = pnand %p370, %p371
      %p373 = pneg %p372
      // Predicated region
      $region41: #{tpu_custom_call.1} parent=5 // pred_check
        _
      $region42: #{tpu_custom_call.1} parent=5 // pred_check_branch
        %375 = sbr.rel (%p372) target = $region44
      $region43: #{tpu_custom_call.1} parent=5 // pred_region
        %s376 = ssub.s32 %s29, 1
        %s377 = sand.u32 %s58, 1
        %s378 = scalar_lea.sflag [#allocation6], %s377
        %s379 = sand.u32 %s58, 1
        %s380 = smul.addr %s379, 256
        %s381 = scalar_lea.vmem [#allocation5], %s380
        // Predicated region
        $region45: #{tpu_custom_call.1} parent=43 // pred_check
          %p382 = pneg %p71
        $region46: #{tpu_custom_call.1} parent=43 // pred_check_branch
          %384 = sbr.rel (%p382) target = $region48
        $region47: #{tpu_custom_call.1} parent=43 // pred_region
          %385 = dma.done %s378, 4096
        $region48: #{tpu_custom_call.1} parent=43 // pred_fallthru
          _
        // Predicated region
        $region49: #{tpu_custom_call.1} parent=43 // pred_check
          %p386 = pneg %p92
        $region50: #{tpu_custom_call.1} parent=43 // pred_check_branch
          %388 = sbr.rel (%p386) target = $region52
        $region51: #{tpu_custom_call.1} parent=43 // pred_region
          %389 = dma.done [#allocation9], 256
        $region52: #{tpu_custom_call.1} parent=43 // pred_fallthru
          _
        // Predicated region
        $region53: #{tpu_custom_call.1} parent=43 // pred_check
          %p390 = pneg %p113
        $region54: #{tpu_custom_call.1} parent=43 // pred_check_branch
          %392 = sbr.rel (%p390) target = $region56
        $region55: #{tpu_custom_call.1} parent=43 // pred_region
          %393 = dma.done [#allocation9], 4096
        $region56: #{tpu_custom_call.1} parent=43 // pred_fallthru
          _
        // Predicated region
        $region57: #{tpu_custom_call.1} parent=43 // pred_check
          %p394 = pneg %p155
        $region58: #{tpu_custom_call.1} parent=43 // pred_check_branch
          %396 = sbr.rel (%p394) target = $region60
        $region59: #{tpu_custom_call.1} parent=43 // pred_region
          %397 = dma.done [#allocation12], 1024
        $region60: #{tpu_custom_call.1} parent=43 // pred_fallthru
          _
        %s398 = sand.u32 %s58, 1
        %s399 = scalar_lea.sflag [#allocation6], %s398
        %s400 = sand.u32 %s58, 1
        %s401 = smul.addr %s400, 256
        %s402 = scalar_lea.vmem [#allocation5], %s401
        %p403 = pneg %p71
        %p404 = pneg %p68
        %p405 = pneg %p92
        %p406 = pneg %p89
        %p407 = pneg %p113
        %p408 = pneg %p110
        %p409 = pneg %p134
        %p410 = pneg %p131
        %p411 = pneg %p155
        %p412 = pneg %p152
        %p413 = pneg %p176
        %p414 = pneg %p173
        %p415 = pneg %p206
        %p416 = pneg %p203
        %s417 = sand.u32 %s193, 1
        %s418 = scalar_lea.sflag [#allocation7], %s417
        %s419 = sand.u32 %s193, 1
        %s420 = smul.addr %s419, 8
        %s421 = scalar_lea.vmem [#allocation13], %s420
        %p422 = pneg %p232
        %p423 = pneg %p229
        %s424 = sand.u32 %s219, 1
        %s425 = scalar_lea.sflag [#allocation15], %s424
        %s426 = sand.u32 %s219, 1
        %s427 = smul.addr %s426, 32
        %s428 = scalar_lea.vmem [#allocation14], %s427
        %p429 = pneg %p258
        %p430 = pneg %p255
        %p431 = scmp.lt.s32.totalorder %s38, 1
        %s432 = scalar_select %p431, %s38, 1
        %s433 = smul.addr %s432, 8
        %s434 = scalar_lea.vmem %s9, %s433
        %p435 = pneg %p284
        %p436 = pneg %p281
        %p437 = scmp.lt.s32.totalorder %s38, 1
        %s438 = scalar_select %p437, %s38, 1
        %s439 = smul.addr %s438, 8
        %s440 = scalar_lea.vmem %s10, %s439
        %s441 = smul.u32 %s38, 3
        %s442 = sadd.s32 %s441, %s39
        %s443 = smul.u32 16, %s442
        %s444 = smul.u32 %s38, 3
        %s445 = sadd.s32 %s444, %s39
        %p446 = scmp.lt.s32.totalorder %s38, 1
        %s447 = scalar_select %p446, %s38, 1
        %s448 = smul.addr %s447, 8
        %s449 = scalar_lea.vmem %s9, %s448
        %p450 = scmp.lt.s32.totalorder %s38, 1
        %s451 = scalar_select %p450, %s38, 1
        %s452 = smul.addr %s451, 8
        %s453 = scalar_lea.vmem %s10, %s452
        %v455 = vld [vmem:[#allocation10] sm:$0xf]
        %v456 = vld [vmem:[#allocation10 + $0x4] sm:$0xf]
        %v457 = vld [vmem:[#allocation10 + $0x8] sm:$0xf]
        %v458 = vld [vmem:[#allocation10 + $0xc] sm:$0xf]
        %v459 = vld [vmem:[#allocation10 + $0x10] sm:$0xf]
        %v460 = vld [vmem:[#allocation10 + $0x14] sm:$0xf]
        %v461 = vld [vmem:[#allocation10 + $0x18] sm:$0xf]
        %v462 = vld [vmem:[#allocation10 + $0x1c] sm:$0xf]
        %v463 = vld [vmem:[#allocation10 + $0x20] sm:$0xf]
        %v464 = vld [vmem:[#allocation10 + $0x24] sm:$0xf]
        %v465 = vld [vmem:[#allocation10 + $0x28] sm:$0xf]
        %v466 = vld [vmem:[#allocation10 + $0x2c] sm:$0xf]
        %v467 = vld [vmem:[#allocation10 + $0x30] sm:$0xf]
        %v468 = vld [vmem:[#allocation10 + $0x34] sm:$0xf]
        %v469 = vld [vmem:[#allocation10 + $0x38] sm:$0xf]
        %v470 = vld [vmem:[#allocation10 + $0x3c] sm:$0xf]
        %v471 = vld [vmem:[#allocation10 + $0x40] sm:$0xf]
        %v472 = vld [vmem:[#allocation10 + $0x44] sm:$0xf]
        %v473 = vld [vmem:[#allocation10 + $0x48] sm:$0xf]
        %v474 = vld [vmem:[#allocation10 + $0x4c] sm:$0xf]
        %v475 = vld [vmem:[#allocation10 + $0x50] sm:$0xf]
        %v476 = vld [vmem:[#allocation10 + $0x54] sm:$0xf]
        %v477 = vld [vmem:[#allocation10 + $0x58] sm:$0xf]
        %v478 = vld [vmem:[#allocation10 + $0x5c] sm:$0xf]
        %v479 = vld [vmem:[#allocation10 + $0x60] sm:$0xf]
        %v480 = vld [vmem:[#allocation10 + $0x64] sm:$0xf]
        %v481 = vld [vmem:[#allocation10 + $0x68] sm:$0xf]
        %v482 = vld [vmem:[#allocation10 + $0x6c] sm:$0xf]
        %v483 = vld [vmem:[#allocation10 + $0x70] sm:$0xf]
        %v484 = vld [vmem:[#allocation10 + $0x74] sm:$0xf]
        %v485 = vld [vmem:[#allocation10 + $0x78] sm:$0xf]
        %v486 = vld [vmem:[#allocation10 + $0x7c] sm:$0xf]
        %v487 = vld [vmem:[#allocation10 + $0x80] sm:$0xf]
        %v488 = vld [vmem:[#allocation10 + $0x84] sm:$0xf]
        %v489 = vld [vmem:[#allocation10 + $0x88] sm:$0xf]
        %v490 = vld [vmem:[#allocation10 + $0x8c] sm:$0xf]
        %v491 = vld [vmem:[#allocation10 + $0x90] sm:$0xf]
        %v492 = vld [vmem:[#allocation10 + $0x94] sm:$0xf]
        %v493 = vld [vmem:[#allocation10 + $0x98] sm:$0xf]
        %v494 = vld [vmem:[#allocation10 + $0x9c] sm:$0xf]
        %v495 = vld [vmem:[#allocation10 + $0xa0] sm:$0xf]
        %v496 = vld [vmem:[#allocation10 + $0xa4] sm:$0xf]
        %v497 = vld [vmem:[#allocation10 + $0xa8] sm:$0xf]
        %v498 = vld [vmem:[#allocation10 + $0xac] sm:$0xf]
        %v499 = vld [vmem:[#allocation10 + $0xb0] sm:$0xf]
        %v500 = vld [vmem:[#allocation10 + $0xb4] sm:$0xf]
        %v501 = vld [vmem:[#allocation10 + $0xb8] sm:$0xf]
        %v502 = vld [vmem:[#allocation10 + $0xbc] sm:$0xf]
        %v503 = vld [vmem:[#allocation10 + $0xc0] sm:$0xf]
        %v504 = vld [vmem:[#allocation10 + $0xc4] sm:$0xf]
        %v505 = vld [vmem:[#allocation10 + $0xc8] sm:$0xf]
        %v506 = vld [vmem:[#allocation10 + $0xcc] sm:$0xf]
        %v507 = vld [vmem:[#allocation10 + $0xd0] sm:$0xf]
        %v508 = vld [vmem:[#allocation10 + $0xd4] sm:$0xf]
        %v509 = vld [vmem:[#allocation10 + $0xd8] sm:$0xf]
        %v510 = vld [vmem:[#allocation10 + $0xdc] sm:$0xf]
        %v511 = vld [vmem:[#allocation10 + $0xe0] sm:$0xf]
        %v512 = vld [vmem:[#allocation10 + $0xe4] sm:$0xf]
        %v513 = vld [vmem:[#allocation10 + $0xe8] sm:$0xf]
        %v514 = vld [vmem:[#allocation10 + $0xec] sm:$0xf]
        %v515 = vld [vmem:[#allocation10 + $0xf0] sm:$0xf]
        %v516 = vld [vmem:[#allocation10 + $0xf4] sm:$0xf]
        %v517 = vld [vmem:[#allocation10 + $0xf8] sm:$0xf]
        %v518 = vld [vmem:[#allocation10 + $0xfc] sm:$0xf]
        %v519 = vld [vmem:[#allocation11] sm:$0xf]
        %v520 = vld [vmem:[#allocation11 + $0x4] sm:$0xf]
        %v521 = vld [vmem:[#allocation11 + $0x8] sm:$0xf]
        %v522 = vld [vmem:[#allocation11 + $0xc] sm:$0xf]
        %v523 = vld [vmem:[#allocation11 + $0x10] sm:$0xf]
        %v524 = vld [vmem:[#allocation11 + $0x14] sm:$0xf]
        %v525 = vld [vmem:[#allocation11 + $0x18] sm:$0xf]
        %v526 = vld [vmem:[#allocation11 + $0x1c] sm:$0xf]
        %v527 = vld [vmem:[#allocation11 + $0x20] sm:$0xf]
        %v528 = vld [vmem:[#allocation11 + $0x24] sm:$0xf]
        %v529 = vld [vmem:[#allocation11 + $0x28] sm:$0xf]
        %v530 = vld [vmem:[#allocation11 + $0x2c] sm:$0xf]
        %v531 = vld [vmem:[#allocation11 + $0x30] sm:$0xf]
        %v532 = vld [vmem:[#allocation11 + $0x34] sm:$0xf]
        %v533 = vld [vmem:[#allocation11 + $0x38] sm:$0xf]
        %v534 = vld [vmem:[#allocation11 + $0x3c] sm:$0xf]
        %v535 = vld [vmem:[%s4] sm:$0x1]
        %v536 = vld [vmem:[%s6] sm:$0x1]
        %p537 = scmp.eq.s32.totalorder %s39, 0
        // Predicated region
        $region61: #{tpu_custom_call.1} parent=43 // pred_check
          %p538 = pneg %p537
        $region62: #{tpu_custom_call.1} parent=43 // pred_check_branch
          %540 = sbr.rel (%p538) target = $region64
        $region63: #{tpu_custom_call.1} parent=43 // pred_region
          %v541 = vld [vmem:[#allocation8] sm:$0xff]
          %v542 = vld [vmem:[#allocation8 + $0x8] sm:$0xff]
          %v544 = vlaneseq
          %v545 = vshrl.u32 %v544, 7
          %v546 = vsub.s32 0, %v545
          %v547 = vrot.slane %v535, %v546
          %v551 = vunpack.c.l.b16 %v541
          %v552 = vunpack.c.h.b16 %v541
          %v553 = vunpack.c.l.b16 %v542
          %v554 = vunpack.c.h.b16 %v542
          %v555 = vpack.c.b16 %v551, %v551
          %v556 = vpack.c.b16 %v552, %v552
          %v557 = vpack.c.b16 %v553, %v553
          %v558 = vpack.c.b16 %v554, %v554
          %v627 = vunpack.c.l.b16 %v455
          %v628 = vunpack.c.l.b16 %v456
          %v629 = vunpack.c.l.b16 %v457
          %v630 = vunpack.c.l.b16 %v458
          %v631 = vunpack.c.l.b16 %v459
          %v632 = vunpack.c.l.b16 %v460
          %v633 = vunpack.c.l.b16 %v461
          %v634 = vunpack.c.l.b16 %v462
          %v635 = vunpack.c.l.b16 %v463
          %v636 = vunpack.c.l.b16 %v464
          %v637 = vunpack.c.l.b16 %v465
          %v638 = vunpack.c.l.b16 %v466
          %v639 = vunpack.c.l.b16 %v467
          %v640 = vunpack.c.l.b16 %v468
          %v641 = vunpack.c.l.b16 %v469
          %v642 = vunpack.c.l.b16 %v470
          %v643 = vunpack.c.l.b16 %v471
          %v644 = vunpack.c.l.b16 %v472
          %v645 = vunpack.c.l.b16 %v473
          %v646 = vunpack.c.l.b16 %v474
          %v647 = vunpack.c.l.b16 %v475
          %v648 = vunpack.c.l.b16 %v476
          %v649 = vunpack.c.l.b16 %v477
          %v650 = vunpack.c.l.b16 %v478
          %v651 = vunpack.c.l.b16 %v479
          %v652 = vunpack.c.l.b16 %v480
          %v653 = vunpack.c.l.b16 %v481
          %v654 = vunpack.c.l.b16 %v482
          %v655 = vunpack.c.l.b16 %v483
          %v656 = vunpack.c.l.b16 %v484
          %v657 = vunpack.c.l.b16 %v485
          %v658 = vunpack.c.l.b16 %v486
          %v659 = vunpack.c.l.b16 %v487
          %v660 = vunpack.c.l.b16 %v488
          %v661 = vunpack.c.l.b16 %v489
          %v662 = vunpack.c.l.b16 %v490
          %v663 = vunpack.c.l.b16 %v491
          %v664 = vunpack.c.l.b16 %v492
          %v665 = vunpack.c.l.b16 %v493
          %v666 = vunpack.c.l.b16 %v494
          %v667 = vunpack.c.l.b16 %v495
          %v668 = vunpack.c.l.b16 %v496
          %v669 = vunpack.c.l.b16 %v497
          %v670 = vunpack.c.l.b16 %v498
          %v671 = vunpack.c.l.b16 %v499
          %v672 = vunpack.c.l.b16 %v500
          %v673 = vunpack.c.l.b16 %v501
          %v674 = vunpack.c.l.b16 %v502
          %v675 = vunpack.c.l.b16 %v503
          %v676 = vunpack.c.l.b16 %v504
          %v677 = vunpack.c.l.b16 %v505
          %v678 = vunpack.c.l.b16 %v506
          %v679 = vunpack.c.l.b16 %v507
          %v680 = vunpack.c.l.b16 %v508
          %v681 = vunpack.c.l.b16 %v509
          %v682 = vunpack.c.l.b16 %v510
          %v683 = vunpack.c.l.b16 %v511
          %v684 = vunpack.c.l.b16 %v512
          %v685 = vunpack.c.l.b16 %v513
          %v686 = vunpack.c.l.b16 %v514
          %v687 = vunpack.c.l.b16 %v515
          %v688 = vunpack.c.l.b16 %v516
          %v689 = vunpack.c.l.b16 %v517
          %v690 = vunpack.c.l.b16 %v518
          %v691 = vpack.c.b16 %v628, %v627
          %v692 = vpack.c.b16 %v630, %v629
          %v693 = vpack.c.b16 %v632, %v631
          %v694 = vpack.c.b16 %v634, %v633
          %v695 = vpack.c.b16 %v636, %v635
          %v696 = vpack.c.b16 %v638, %v637
          %v697 = vpack.c.b16 %v640, %v639
          %v698 = vpack.c.b16 %v642, %v641
          %v699 = vpack.c.b16 %v644, %v643
          %v700 = vpack.c.b16 %v646, %v645
          %v701 = vpack.c.b16 %v648, %v647
          %v702 = vpack.c.b16 %v650, %v649
          %v703 = vpack.c.b16 %v652, %v651
          %v704 = vpack.c.b16 %v654, %v653
          %v705 = vpack.c.b16 %v656, %v655
          %v706 = vpack.c.b16 %v658, %v657
          %v707 = vpack.c.b16 %v660, %v659
          %v708 = vpack.c.b16 %v662, %v661
          %v709 = vpack.c.b16 %v664, %v663
          %v710 = vpack.c.b16 %v666, %v665
          %v711 = vpack.c.b16 %v668, %v667
          %v712 = vpack.c.b16 %v670, %v669
          %v713 = vpack.c.b16 %v672, %v671
          %v714 = vpack.c.b16 %v674, %v673
          %v715 = vpack.c.b16 %v676, %v675
          %v716 = vpack.c.b16 %v678, %v677
          %v717 = vpack.c.b16 %v680, %v679
          %v718 = vpack.c.b16 %v682, %v681
          %v719 = vpack.c.b16 %v684, %v683
          %v720 = vpack.c.b16 %v686, %v685
          %v721 = vpack.c.b16 %v688, %v687
          %v722 = vpack.c.b16 %v690, %v689
          %755 = vmatprep.subr.bf16.mxu0 0
          %756 = vmatpush1.bf16.msra.mxu0 %v691
          %757 = vmatprep.subr.bf16.mxu0 0
          %758 = vmatpush1.bf16.msra.mxu0 %v692
          %759 = vmatprep.subr.bf16.mxu0 0
          %760 = vmatpush1.bf16.msra.mxu0 %v693
          %761 = vmatprep.subr.bf16.mxu0 0
          %762 = vmatpush1.bf16.msra.mxu0 %v694
          %763 = vmatprep.subr.bf16.mxu0 0
          %764 = vmatpush1.bf16.msra.mxu0 %v695
          %765 = vmatprep.subr.bf16.mxu0 0
          %766 = vmatpush1.bf16.msra.mxu0 %v696
          %767 = vmatprep.subr.bf16.mxu0 0
          %768 = vmatpush1.bf16.msra.mxu0 %v697
          %769 = vmatprep.subr.bf16.mxu0 0
          %770 = vmatpush1.bf16.msra.mxu0 %v698
          %771 = vmatprep.subr.bf16.mxu0 0
          %772 = vmatpush1.bf16.msra.mxu0 %v699
          %773 = vmatprep.subr.bf16.mxu0 0
          %774 = vmatpush1.bf16.msra.mxu0 %v700
          %775 = vmatprep.subr.bf16.mxu0 0
          %776 = vmatpush1.bf16.msra.mxu0 %v701
          %777 = vmatprep.subr.bf16.mxu0 0
          %778 = vmatpush1.bf16.msra.mxu0 %v702
          %779 = vmatprep.subr.bf16.mxu0 0
          %780 = vmatpush1.bf16.msra.mxu0 %v703
          %781 = vmatprep.subr.bf16.mxu0 0
          %782 = vmatpush1.bf16.msra.mxu0 %v704
          %783 = vmatprep.subr.bf16.mxu0 0
          %784 = vmatpush1.bf16.msra.mxu0 %v705
          %785 = vmatprep.subr.bf16.mxu0 0
          %786 = vmatpush1.bf16.msra.mxu0 %v706
          %787 = vmatprep.mubr.bf16.mxu0 %v556
          %788 = vmatmul.mubr.bf16.gmra.mrb[0].mxu0 %v555
          %v789 = vpop.f32.mrb[0].mxu0
          %v790 = vadd.f32 %v547, %v789
          %v791 = vpop.f32.mrb[0].mxu0
          %v792 = vpop.f32.mrb[0].mxu0
          %v793 = vpop.f32.mrb[0].mxu0
          %794 = vdwg.mxu0
          %795 = vmatprep.subr.bf16.mxu0 0
          %796 = vmatpush1.bf16.msra.mxu0 %v707
          %797 = vmatprep.subr.bf16.mxu0 0
          %798 = vmatpush1.bf16.msra.mxu0 %v708
          %799 = vmatprep.subr.bf16.mxu0 0
          %800 = vmatpush1.bf16.msra.mxu0 %v709
          %801 = vmatprep.subr.bf16.mxu0 0
          %802 = vmatpush1.bf16.msra.mxu0 %v710
          %803 = vmatprep.subr.bf16.mxu0 0
          %804 = vmatpush1.bf16.msra.mxu0 %v711
          %805 = vmatprep.subr.bf16.mxu0 0
          %806 = vmatpush1.bf16.msra.mxu0 %v712
          %807 = vmatprep.subr.bf16.mxu0 0
          %808 = vmatpush1.bf16.msra.mxu0 %v713
          %809 = vmatprep.subr.bf16.mxu0 0
          %810 = vmatpush1.bf16.msra.mxu0 %v714
          %811 = vmatprep.subr.bf16.mxu0 0
          %812 = vmatpush1.bf16.msra.mxu0 %v715
          %813 = vmatprep.subr.bf16.mxu0 0
          %814 = vmatpush1.bf16.msra.mxu0 %v716
          %815 = vmatprep.subr.bf16.mxu0 0
          %816 = vmatpush1.bf16.msra.mxu0 %v717
          %817 = vmatprep.subr.bf16.mxu0 0
          %818 = vmatpush1.bf16.msra.mxu0 %v718
          %819 = vmatprep.subr.bf16.mxu0 0
          %820 = vmatpush1.bf16.msra.mxu0 %v719
          %821 = vmatprep.subr.bf16.mxu0 0
          %822 = vmatpush1.bf16.msra.mxu0 %v720
          %823 = vmatprep.subr.bf16.mxu0 0
          %824 = vmatpush1.bf16.msra.mxu0 %v721
          %825 = vmatprep.subr.bf16.mxu0 0
          %826 = vmatpush1.bf16.msra.mxu0 %v722
          %827 = vmatprep.mubr.bf16.mxu0 %v558
          %828 = vmatmul.mubr.bf16.gmra.mrb[0].mxu0 %v557
          %v829 = vpop.f32.mrb[0].mxu0
          %v830 = vadd.f32 %v790, %v829
          %v831 = vpop.f32.mrb[0].mxu0
          %v832 = vpop.f32.mrb[0].mxu0
          %v833 = vpop.f32.mrb[0].mxu0
          %834 = vdwg.mxu0
          %v835 = vmax.f32 %v830, 0.0
          %v836 = vpack.c.bf16 %v835, %v835
          %v838 = vlaneseq
          %v839 = vshrl.u32 %v838, 7
          %v840 = vsub.s32 0, %v839
          %v841 = vrot.slane %v536, %v840
          %v859 = vunpack.c.l.b16 %v519
          %v860 = vunpack.c.l.b16 %v520
          %v861 = vunpack.c.l.b16 %v521
          %v862 = vunpack.c.l.b16 %v522
          %v863 = vunpack.c.l.b16 %v523
          %v864 = vunpack.c.l.b16 %v524
          %v865 = vunpack.c.l.b16 %v525
          %v866 = vunpack.c.l.b16 %v526
          %v867 = vunpack.c.l.b16 %v527
          %v868 = vunpack.c.l.b16 %v528
          %v869 = vunpack.c.l.b16 %v529
          %v870 = vunpack.c.l.b16 %v530
          %v871 = vunpack.c.l.b16 %v531
          %v872 = vunpack.c.l.b16 %v532
          %v873 = vunpack.c.l.b16 %v533
          %v874 = vunpack.c.l.b16 %v534
          %v875 = vpack.c.b16 %v860, %v859
          %v876 = vpack.c.b16 %v862, %v861
          %v877 = vpack.c.b16 %v864, %v863
          %v878 = vpack.c.b16 %v866, %v865
          %v879 = vpack.c.b16 %v868, %v867
          %v880 = vpack.c.b16 %v870, %v869
          %v881 = vpack.c.b16 %v872, %v871
          %v882 = vpack.c.b16 %v874, %v873
          %891 = vmatprep.subr.bf16.mxu0 0
          %892 = vmatpush1.bf16.msra.mxu0 %v875
          %893 = vmatprep.subr.bf16.mxu0 0
          %894 = vmatpush1.bf16.msra.mxu0 %v876
          %895 = vmatprep.subr.bf16.mxu0 0
          %896 = vmatpush1.bf16.msra.mxu0 %v877
          %897 = vmatprep.subr.bf16.mxu0 0
          %898 = vmatpush1.bf16.msra.mxu0 %v878
          %899 = vmatprep.subr.bf16.mxu0 0
          %900 = vmatpush1.bf16.msra.mxu0 %v879
          %901 = vmatprep.subr.bf16.mxu0 0
          %902 = vmatpush1.bf16.msra.mxu0 %v880
          %903 = vmatprep.subr.bf16.mxu0 0
          %904 = vmatpush1.bf16.msra.mxu0 %v881
          %905 = vmatprep.subr.bf16.mxu0 0
          %906 = vmatpush1.bf16.msra.mxu0 %v882
          %907 = vmatprep.subr.bf16.mxu0 0
          %908 = vmatpush1.bf16.msra.mxu0 0
          %909 = vmatprep.subr.bf16.mxu0 0
          %910 = vmatpush1.bf16.msra.mxu0 0
          %911 = vmatprep.subr.bf16.mxu0 0
          %912 = vmatpush1.bf16.msra.mxu0 0
          %913 = vmatprep.subr.bf16.mxu0 0
          %914 = vmatpush1.bf16.msra.mxu0 0
          %915 = vmatprep.subr.bf16.mxu0 0
          %916 = vmatpush1.bf16.msra.mxu0 0
          %917 = vmatprep.subr.bf16.mxu0 0
          %918 = vmatpush1.bf16.msra.mxu0 0
          %919 = vmatprep.subr.bf16.mxu0 0
          %920 = vmatpush1.bf16.msra.mxu0 0
          %921 = vmatprep.subr.bf16.mxu0 0
          %922 = vmatpush1.bf16.msra.mxu0 0
          %923 = vmatprep.mubr.bf16.mxu0 0
          %924 = vmatmul.mubr.bf16.gmra.mrb[0].mxu0 %v836
          %v925 = vpop.f32.mrb[0].mxu0
          %v926 = vadd.f32 %v841, %v925
          %v927 = vpop.f32.mrb[0].mxu0
          %v928 = vpop.f32.mrb[0].mxu0
          %v929 = vpop.f32.mrb[0].mxu0
          %930 = vdwg.mxu0
          %v931 = vtanh.pop %v926
          %v932 = vmul.f32 %v931, 0.088388346
          %933 = vst [vmem:[#allocation2] sm:$0xff] %v932
          %vm934 = vcmask 7168
          %935 = vst.msk [vmem:[%s449] sm:$0xff] %vm934, -1e+30
          %936 = vst.msk [vmem:[%s453] sm:$0xff] %vm934, 0.0
          %937 = vst [vmem:[%s428] sm:$0xff] 0.0
          %938 = vst [vmem:[%s428 + $0x8] sm:$0xff] 0.0
          %939 = vst [vmem:[%s428 + $0x10] sm:$0xff] 0.0
          %940 = vst [vmem:[%s428 + $0x18] sm:$0xff] 0.0
        $region64: #{tpu_custom_call.1} parent=43 // pred_fallthru
          _
        %v941 = vld [vmem:[%s381] sm:$0xff]
        %v942 = vld [vmem:[%s381 + $0x8] sm:$0xff]
        %v943 = vld [vmem:[%s381 + $0x10] sm:$0xff]
        %v944 = vld [vmem:[%s381 + $0x18] sm:$0xff]
        %v945 = vld [vmem:[%s381 + $0x20] sm:$0xff]
        %v946 = vld [vmem:[%s381 + $0x28] sm:$0xff]
        %v947 = vld [vmem:[%s381 + $0x30] sm:$0xff]
        %v948 = vld [vmem:[%s381 + $0x38] sm:$0xff]
        %v949 = vld [vmem:[%s381 + $0x40] sm:$0xff]
        %v950 = vld [vmem:[%s381 + $0x48] sm:$0xff]
        %v951 = vld [vmem:[%s381 + $0x50] sm:$0xff]
        %v952 = vld [vmem:[%s381 + $0x58] sm:$0xff]
        %v953 = vld [vmem:[%s381 + $0x60] sm:$0xff]
        %v954 = vld [vmem:[%s381 + $0x68] sm:$0xff]
        %v955 = vld [vmem:[%s381 + $0x70] sm:$0xff]
        %v956 = vld [vmem:[%s381 + $0x78] sm:$0xff]
        %v957 = vld [vmem:[%s381 + $0x80] sm:$0xff]
        %v958 = vld [vmem:[%s381 + $0x88] sm:$0xff]
        %v959 = vld [vmem:[%s381 + $0x90] sm:$0xff]
        %v960 = vld [vmem:[%s381 + $0x98] sm:$0xff]
        %v961 = vld [vmem:[%s381 + $0xa0] sm:$0xff]
        %v962 = vld [vmem:[%s381 + $0xa8] sm:$0xff]
        %v963 = vld [vmem:[%s381 + $0xb0] sm:$0xff]
        %v964 = vld [vmem:[%s381 + $0xb8] sm:$0xff]
        %v965 = vld [vmem:[%s381 + $0xc0] sm:$0xff]
        %v966 = vld [vmem:[%s381 + $0xc8] sm:$0xff]
        %v967 = vld [vmem:[%s381 + $0xd0] sm:$0xff]
        %v968 = vld [vmem:[%s381 + $0xd8] sm:$0xff]
        %v969 = vld [vmem:[%s381 + $0xe0] sm:$0xff]
        %v970 = vld [vmem:[%s381 + $0xe8] sm:$0xff]
        %v971 = vld [vmem:[%s381 + $0xf0] sm:$0xff]
        %v972 = vld [vmem:[%s381 + $0xf8] sm:$0xff]
        %v974 = vlaneseq
        %v975 = vshrl.u32 %v974, 7
        %v976 = vsub.s32 0, %v975
        %v977 = vrot.slane %v535, %v976
        %v1011 = vunpack.c.l.b16 %v941
        %v1012 = vunpack.c.h.b16 %v941
        %v1013 = vunpack.c.l.b16 %v942
        %v1014 = vunpack.c.h.b16 %v942
        %v1015 = vunpack.c.l.b16 %v943
        %v1016 = vunpack.c.h.b16 %v943
        %v1017 = vunpack.c.l.b16 %v944
        %v1018 = vunpack.c.h.b16 %v944
        %v1019 = vunpack.c.l.b16 %v945
        %v1020 = vunpack.c.h.b16 %v945
        %v1021 = vunpack.c.l.b16 %v946
        %v1022 = vunpack.c.h.b16 %v946
        %v1023 = vunpack.c.l.b16 %v947
        %v1024 = vunpack.c.h.b16 %v947
        %v1025 = vunpack.c.l.b16 %v948
        %v1026 = vunpack.c.h.b16 %v948
        %v1027 = vunpack.c.l.b16 %v949
        %v1028 = vunpack.c.h.b16 %v949
        %v1029 = vunpack.c.l.b16 %v950
        %v1030 = vunpack.c.h.b16 %v950
        %v1031 = vunpack.c.l.b16 %v951
        %v1032 = vunpack.c.h.b16 %v951
        %v1033 = vunpack.c.l.b16 %v952
        %v1034 = vunpack.c.h.b16 %v952
        %v1035 = vunpack.c.l.b16 %v953
        %v1036 = vunpack.c.h.b16 %v953
        %v1037 = vunpack.c.l.b16 %v954
        %v1038 = vunpack.c.h.b16 %v954
        %v1039 = vunpack.c.l.b16 %v955
        %v1040 = vunpack.c.h.b16 %v955
        %v1041 = vunpack.c.l.b16 %v956
        %v1042 = vunpack.c.h.b16 %v956
        %v1043 = vunpack.c.l.b16 %v957
        %v1044 = vunpack.c.h.b16 %v957
        %v1045 = vunpack.c.l.b16 %v958
        %v1046 = vunpack.c.h.b16 %v958
        %v1047 = vunpack.c.l.b16 %v959
        %v1048 = vunpack.c.h.b16 %v959
        %v1049 = vunpack.c.l.b16 %v960
        %v1050 = vunpack.c.h.b16 %v960
        %v1051 = vunpack.c.l.b16 %v961
        %v1052 = vunpack.c.h.b16 %v961
        %v1053 = vunpack.c.l.b16 %v962
        %v1054 = vunpack.c.h.b16 %v962
        %v1055 = vunpack.c.l.b16 %v963
        %v1056 = vunpack.c.h.b16 %v963
        %v1057 = vunpack.c.l.b16 %v964
        %v1058 = vunpack.c.h.b16 %v964
        %v1059 = vunpack.c.l.b16 %v965
        %v1060 = vunpack.c.h.b16 %v965
        %v1061 = vunpack.c.l.b16 %v966
        %v1062 = vunpack.c.h.b16 %v966
        %v1063 = vunpack.c.l.b16 %v967
        %v1064 = vunpack.c.h.b16 %v967
        %v1065 = vunpack.c.l.b16 %v968
        %v1066 = vunpack.c.h.b16 %v968
        %v1067 = vunpack.c.l.b16 %v969
        %v1068 = vunpack.c.h.b16 %v969
        %v1069 = vunpack.c.l.b16 %v970
        %v1070 = vunpack.c.h.b16 %v970
        %v1071 = vunpack.c.l.b16 %v971
        %v1072 = vunpack.c.h.b16 %v971
        %v1073 = vunpack.c.l.b16 %v972
        %v1074 = vunpack.c.h.b16 %v972
        %v1075 = vpack.c.b16 %v1015, %v1011
        %v1076 = vpack.c.b16 %v1016, %v1012
        %v1077 = vpack.c.b16 %v1017, %v1013
        %v1078 = vpack.c.b16 %v1018, %v1014
        %v1079 = vpack.c.b16 %v1023, %v1019
        %v1080 = vpack.c.b16 %v1024, %v1020
        %v1081 = vpack.c.b16 %v1025, %v1021
        %v1082 = vpack.c.b16 %v1026, %v1022
        %v1083 = vpack.c.b16 %v1031, %v1027
        %v1084 = vpack.c.b16 %v1032, %v1028
        %v1085 = vpack.c.b16 %v1033, %v1029
        %v1086 = vpack.c.b16 %v1034, %v1030
        %v1087 = vpack.c.b16 %v1039, %v1035
        %v1088 = vpack.c.b16 %v1040, %v1036
        %v1089 = vpack.c.b16 %v1041, %v1037
        %v1090 = vpack.c.b16 %v1042, %v1038
        %v1091 = vpack.c.b16 %v1047, %v1043
        %v1092 = vpack.c.b16 %v1048, %v1044
        %v1093 = vpack.c.b16 %v1049, %v1045
        %v1094 = vpack.c.b16 %v1050, %v1046
        %v1095 = vpack.c.b16 %v1055, %v1051
        %v1096 = vpack.c.b16 %v1056, %v1052
        %v1097 = vpack.c.b16 %v1057, %v1053
        %v1098 = vpack.c.b16 %v1058, %v1054
        %v1099 = vpack.c.b16 %v1063, %v1059
        %v1100 = vpack.c.b16 %v1064, %v1060
        %v1101 = vpack.c.b16 %v1065, %v1061
        %v1102 = vpack.c.b16 %v1066, %v1062
        %v1103 = vpack.c.b16 %v1071, %v1067
        %v1104 = vpack.c.b16 %v1072, %v1068
        %v1105 = vpack.c.b16 %v1073, %v1069
        %v1106 = vpack.c.b16 %v1074, %v1070
        %v1203 = vunpack.c.l.b16 %v455
        %v1204 = vunpack.c.l.b16 %v456
        %v1205 = vunpack.c.l.b16 %v457
        %v1206 = vunpack.c.l.b16 %v458
        %v1207 = vunpack.c.l.b16 %v459
        %v1208 = vunpack.c.l.b16 %v460
        %v1209 = vunpack.c.l.b16 %v461
        %v1210 = vunpack.c.l.b16 %v462
        %v1211 = vunpack.c.l.b16 %v463
        %v1212 = vunpack.c.l.b16 %v464
        %v1213 = vunpack.c.l.b16 %v465
        %v1214 = vunpack.c.l.b16 %v466
        %v1215 = vunpack.c.l.b16 %v467
        %v1216 = vunpack.c.l.b16 %v468
        %v1217 = vunpack.c.l.b16 %v469
        %v1218 = vunpack.c.l.b16 %v470
        %v1219 = vunpack.c.l.b16 %v471
        %v1220 = vunpack.c.l.b16 %v472
        %v1221 = vunpack.c.l.b16 %v473
        %v1222 = vunpack.c.l.b16 %v474
        %v1223 = vunpack.c.l.b16 %v475
        %v1224 = vunpack.c.l.b16 %v476
        %v1225 = vunpack.c.l.b16 %v477
        %v1226 = vunpack.c.l.b16 %v478
        %v1227 = vunpack.c.l.b16 %v479
        %v1228 = vunpack.c.l.b16 %v480
        %v1229 = vunpack.c.l.b16 %v481
        %v1230 = vunpack.c.l.b16 %v482
        %v1231 = vunpack.c.l.b16 %v483
        %v1232 = vunpack.c.l.b16 %v484
        %v1233 = vunpack.c.l.b16 %v485
        %v1234 = vunpack.c.l.b16 %v486
        %v1235 = vunpack.c.l.b16 %v487
        %v1236 = vunpack.c.l.b16 %v488
        %v1237 = vunpack.c.l.b16 %v489
        %v1238 = vunpack.c.l.b16 %v490
        %v1239 = vunpack.c.l.b16 %v491
        %v1240 = vunpack.c.l.b16 %v492
        %v1241 = vunpack.c.l.b16 %v493
        %v1242 = vunpack.c.l.b16 %v494
        %v1243 = vunpack.c.l.b16 %v495
        %v1244 = vunpack.c.l.b16 %v496
        %v1245 = vunpack.c.l.b16 %v497
        %v1246 = vunpack.c.l.b16 %v498
        %v1247 = vunpack.c.l.b16 %v499
        %v1248 = vunpack.c.l.b16 %v500
        %v1249 = vunpack.c.l.b16 %v501
        %v1250 = vunpack.c.l.b16 %v502
        %v1251 = vunpack.c.l.b16 %v503
        %v1252 = vunpack.c.l.b16 %v504
        %v1253 = vunpack.c.l.b16 %v505
        %v1254 = vunpack.c.l.b16 %v506
        %v1255 = vunpack.c.l.b16 %v507
        %v1256 = vunpack.c.l.b16 %v508
        %v1257 = vunpack.c.l.b16 %v509
        %v1258 = vunpack.c.l.b16 %v510
        %v1259 = vunpack.c.l.b16 %v511
        %v1260 = vunpack.c.l.b16 %v512
        %v1261 = vunpack.c.l.b16 %v513
        %v1262 = vunpack.c.l.b16 %v514
        %v1263 = vunpack.c.l.b16 %v515
        %v1264 = vunpack.c.l.b16 %v516
        %v1265 = vunpack.c.l.b16 %v517
        %v1266 = vunpack.c.l.b16 %v518
        %v1267 = vpack.c.b16 %v1204, %v1203
        %v1268 = vpack.c.b16 %v1206, %v1205
        %v1269 = vpack.c.b16 %v1208, %v1207
        %v1270 = vpack.c.b16 %v1210, %v1209
        %v1271 = vpack.c.b16 %v1212, %v1211
        %v1272 = vpack.c.b16 %v1214, %v1213
        %v1273 = vpack.c.b16 %v1216, %v1215
        %v1274 = vpack.c.b16 %v1218, %v1217
        %v1275 = vpack.c.b16 %v1220, %v1219
        %v1276 = vpack.c.b16 %v1222, %v1221
        %v1277 = vpack.c.b16 %v1224, %v1223
        %v1278 = vpack.c.b16 %v1226, %v1225
        %v1279 = vpack.c.b16 %v1228, %v1227
        %v1280 = vpack.c.b16 %v1230, %v1229
        %v1281 = vpack.c.b16 %v1232, %v1231
        %v1282 = vpack.c.b16 %v1234, %v1233
        %v1283 = vpack.c.b16 %v1236, %v1235
        %v1284 = vpack.c.b16 %v1238, %v1237
        %v1285 = vpack.c.b16 %v1240, %v1239
        %v1286 = vpack.c.b16 %v1242, %v1241
        %v1287 = vpack.c.b16 %v1244, %v1243
        %v1288 = vpack.c.b16 %v1246, %v1245
        %v1289 = vpack.c.b16 %v1248, %v1247
        %v1290 = vpack.c.b16 %v1250, %v1249
        %v1291 = vpack.c.b16 %v1252, %v1251
        %v1292 = vpack.c.b16 %v1254, %v1253
        %v1293 = vpack.c.b16 %v1256, %v1255
        %v1294 = vpack.c.b16 %v1258, %v1257
        %v1295 = vpack.c.b16 %v1260, %v1259
        %v1296 = vpack.c.b16 %v1262, %v1261
        %v1297 = vpack.c.b16 %v1264, %v1263
        %v1298 = vpack.c.b16 %v1266, %v1265
        %1331 = vmatprep.subr.bf16.mxu0 0
        %1332 = vmatpush1.bf16.msra.mxu0 %v1267
        %1333 = vmatprep.subr.bf16.mxu0 0
        %1334 = vmatpush1.bf16.msra.mxu0 %v1268
        %1335 = vmatprep.subr.bf16.mxu0 0
        %1336 = vmatpush1.bf16.msra.mxu0 %v1269
        %1337 = vmatprep.subr.bf16.mxu0 0
        %1338 = vmatpush1.bf16.msra.mxu0 %v1270
        %1339 = vmatprep.subr.bf16.mxu0 0
        %1340 = vmatpush1.bf16.msra.mxu0 %v1271
        %1341 = vmatprep.subr.bf16.mxu0 0
        %1342 = vmatpush1.bf16.msra.mxu0 %v1272
        %1343 = vmatprep.subr.bf16.mxu0 0
        %1344 = vmatpush1.bf16.msra.mxu0 %v1273
        %1345 = vmatprep.subr.bf16.mxu0 0
        %1346 = vmatpush1.bf16.msra.mxu0 %v1274
        %1347 = vmatprep.subr.bf16.mxu0 0
        %1348 = vmatpush1.bf16.msra.mxu0 %v1275
        %1349 = vmatprep.subr.bf16.mxu0 0
        %1350 = vmatpush1.bf16.msra.mxu0 %v1276
        %1351 = vmatprep.subr.bf16.mxu0 0
        %1352 = vmatpush1.bf16.msra.mxu0 %v1277
        %1353 = vmatprep.subr.bf16.mxu0 0
        %1354 = vmatpush1.bf16.msra.mxu0 %v1278
        %1355 = vmatprep.subr.bf16.mxu0 0
        %1356 = vmatpush1.bf16.msra.mxu0 %v1279
        %1357 = vmatprep.subr.bf16.mxu0 0
        %1358 = vmatpush1.bf16.msra.mxu0 %v1280
        %1359 = vmatprep.subr.bf16.mxu0 0
        %1360 = vmatpush1.bf16.msra.mxu0 %v1281
        %1361 = vmatprep.subr.bf16.mxu0 0
        %1362 = vmatpush1.bf16.msra.mxu0 %v1282
        %1363 = vmatprep.mubr.bf16.mxu0 %v1076
        %1364 = vmatmul.mubr.bf16.gmra.mrb[0].mxu0 %v1075
        %v1365 = vpop.f32.mrb[0].mxu0
        %v1366 = vadd.f32 %v977, %v1365
        %v1367 = vpop.f32.mrb[0].mxu0
        %v1368 = vpop.f32.mrb[0].mxu0
        %v1369 = vadd.f32 %v977, %v1368
        %v1370 = vpop.f32.mrb[0].mxu0
        %1371 = vmatprep.mubr.bf16.mxu0 %v1080
        %1372 = vmatmul.mubr.bf16.gmra.mrb[0].mxu0 %v1079
        %v1373 = vpop.f32.mrb[0].mxu0
        %v1374 = vadd.f32 %v977, %v1373
        %v1375 = vpop.f32.mrb[0].mxu0
        %v1376 = vpop.f32.mrb[0].mxu0
        %v1377 = vadd.f32 %v977, %v1376
        %v1378 = vpop.f32.mrb[0].mxu0
        %1379 = vmatprep.mubr.bf16.mxu0 %v1084
        %1380 = vmatmul.mubr.bf16.gmra.mrb[0].mxu0 %v1083
        %v1381 = vpop.f32.mrb[0].mxu0
        %v1382 = vadd.f32 %v977, %v1381
        %v1383 = vpop.f32.mrb[0].mxu0
        %v1384 = vpop.f32.mrb[0].mxu0
        %v1385 = vadd.f32 %v977, %v1384
        %v1386 = vpop.f32.mrb[0].mxu0
        %1387 = vmatprep.mubr.bf16.mxu0 %v1088
        %1388 = vmatmul.mubr.bf16.gmra.mrb[0].mxu0 %v1087
        %v1389 = vpop.f32.mrb[0].mxu0
        %v1390 = vadd.f32 %v977, %v1389
        %v1391 = vpop.f32.mrb[0].mxu0
        %v1392 = vpop.f32.mrb[0].mxu0
        %v1393 = vadd.f32 %v977, %v1392
        %v1394 = vpop.f32.mrb[0].mxu0
        %1395 = vmatprep.mubr.bf16.mxu0 %v1092
        %1396 = vmatmul.mubr.bf16.gmra.mrb[0].mxu0 %v1091
        %v1397 = vpop.f32.mrb[0].mxu0
        %v1398 = vadd.f32 %v977, %v1397
        %v1399 = vpop.f32.mrb[0].mxu0
        %v1400 = vpop.f32.mrb[0].mxu0
        %v1401 = vadd.f32 %v977, %v1400
        %v1402 = vpop.f32.mrb[0].mxu0
        %1403 = vmatprep.mubr.bf16.mxu0 %v1096
        %1404 = vmatmul.mubr.bf16.gmra.mrb[0].mxu0 %v1095
        %v1405 = vpop.f32.mrb[0].mxu0
        %v1406 = vadd.f32 %v977, %v1405
        %v1407 = vpop.f32.mrb[0].mxu0
        %v1408 = vpop.f32.mrb[0].mxu0
        %v1409 = vadd.f32 %v977, %v1408
        %v1410 = vpop.f32.mrb[0].mxu0
        %1411 = vmatprep.mubr.bf16.mxu0 %v1100
        %1412 = vmatmul.mubr.bf16.gmra.mrb[0].mxu0 %v1099
        %v1413 = vpop.f32.mrb[0].mxu0
        %v1414 = vadd.f32 %v977, %v1413
        %v1415 = vpop.f32.mrb[0].mxu0
        %v1416 = vpop.f32.mrb[0].mxu0
        %v1417 = vadd.f32 %v977, %v1416
        %v1418 = vpop.f32.mrb[0].mxu0
        %1419 = vmatprep.mubr.bf16.mxu0 %v1104
        %1420 = vmatmul.mubr.bf16.gmra.mrb[0].mxu0 %v1103
        %v1421 = vpop.f32.mrb[0].mxu0
        %v1422 = vadd.f32 %v977, %v1421
        %v1423 = vpop.f32.mrb[0].mxu0
        %v1424 = vpop.f32.mrb[0].mxu0
        %v1425 = vadd.f32 %v977, %v1424
        %v1426 = vpop.f32.mrb[0].mxu0
        %1427 = vdwg.mxu0
        %1428 = vmatprep.subr.bf16.mxu0 0
        %1429 = vmatpush1.bf16.msra.mxu0 %v1283
        %1430 = vmatprep.subr.bf16.mxu0 0
        %1431 = vmatpush1.bf16.msra.mxu0 %v1284
        %1432 = vmatprep.subr.bf16.mxu0 0
        %1433 = vmatpush1.bf16.msra.mxu0 %v1285
        %1434 = vmatprep.subr.bf16.mxu0 0
        %1435 = vmatpush1.bf16.msra.mxu0 %v1286
        %1436 = vmatprep.subr.bf16.mxu0 0
        %1437 = vmatpush1.bf16.msra.mxu0 %v1287
        %1438 = vmatprep.subr.bf16.mxu0 0
        %1439 = vmatpush1.bf16.msra.mxu0 %v1288
        %1440 = vmatprep.subr.bf16.mxu0 0
        %1441 = vmatpush1.bf16.msra.mxu0 %v1289
        %1442 = vmatprep.subr.bf16.mxu0 0
        %1443 = vmatpush1.bf16.msra.mxu0 %v1290
        %1444 = vmatprep.subr.bf16.mxu0 0
        %1445 = vmatpush1.bf16.msra.mxu0 %v1291
        %1446 = vmatprep.subr.bf16.mxu0 0
        %1447 = vmatpush1.bf16.msra.mxu0 %v1292
        %1448 = vmatprep.subr.bf16.mxu0 0
        %1449 = vmatpush1.bf16.msra.mxu0 %v1293
        %1450 = vmatprep.subr.bf16.mxu0 0
        %1451 = vmatpush1.bf16.msra.mxu0 %v1294
        %1452 = vmatprep.subr.bf16.mxu0 0
        %1453 = vmatpush1.bf16.msra.mxu0 %v1295
        %1454 = vmatprep.subr.bf16.mxu0 0
        %1455 = vmatpush1.bf16.msra.mxu0 %v1296
        %1456 = vmatprep.subr.bf16.mxu0 0
        %1457 = vmatpush1.bf16.msra.mxu0 %v1297
        %1458 = vmatprep.subr.bf16.mxu0 0
        %1459 = vmatpush1.bf16.msra.mxu0 %v1298
        %1460 = vmatprep.mubr.bf16.mxu0 %v1078
        %1461 = vmatmul.mubr.bf16.gmra.mrb[0].mxu0 %v1077
        %v1462 = vpop.f32.mrb[0].mxu0
        %v1463 = vadd.f32 %v1366, %v1462
        %v1464 = vpop.f32.mrb[0].mxu0
        %v1465 = vpop.f32.mrb[0].mxu0
        %v1466 = vadd.f32 %v1369, %v1465
        %v1467 = vpop.f32.mrb[0].mxu0
        %1468 = vmatprep.mubr.bf16.mxu0 %v1082
        %1469 = vmatmul.mubr.bf16.gmra.mrb[0].mxu0 %v1081
        %v1470 = vpop.f32.mrb[0].mxu0
        %v1471 = vadd.f32 %v1374, %v1470
        %v1472 = vpop.f32.mrb[0].mxu0
        %v1473 = vpop.f32.mrb[0].mxu0
        %v1474 = vadd.f32 %v1377, %v1473
        %v1475 = vpop.f32.mrb[0].mxu0
        %1476 = vmatprep.mubr.bf16.mxu0 %v1086
        %1477 = vmatmul.mubr.bf16.gmra.mrb[0].mxu0 %v1085
        %v1478 = vpop.f32.mrb[0].mxu0
        %v1479 = vadd.f32 %v1382, %v1478
        %v1480 = vpop.f32.mrb[0].mxu0
        %v1481 = vpop.f32.mrb[0].mxu0
        %v1482 = vadd.f32 %v1385, %v1481
        %v1483 = vpop.f32.mrb[0].mxu0
        %1484 = vmatprep.mubr.bf16.mxu0 %v1090
        %1485 = vmatmul.mubr.bf16.gmra.mrb[0].mxu0 %v1089
        %v1486 = vpop.f32.mrb[0].mxu0
        %v1487 = vadd.f32 %v1390, %v1486
        %v1488 = vpop.f32.mrb[0].mxu0
        %v1489 = vpop.f32.mrb[0].mxu0
        %v1490 = vadd.f32 %v1393, %v1489
        %v1491 = vpop.f32.mrb[0].mxu0
        %1492 = vmatprep.mubr.bf16.mxu0 %v1094
        %1493 = vmatmul.mubr.bf16.gmra.mrb[0].mxu0 %v1093
        %v1494 = vpop.f32.mrb[0].mxu0
        %v1495 = vadd.f32 %v1398, %v1494
        %v1496 = vpop.f32.mrb[0].mxu0
        %v1497 = vpop.f32.mrb[0].mxu0
        %v1498 = vadd.f32 %v1401, %v1497
        %v1499 = vpop.f32.mrb[0].mxu0
        %1500 = vmatprep.mubr.bf16.mxu0 %v1098
        %1501 = vmatmul.mubr.bf16.gmra.mrb[0].mxu0 %v1097
        %v1502 = vpop.f32.mrb[0].mxu0
        %v1503 = vadd.f32 %v1406, %v1502
        %v1504 = vpop.f32.mrb[0].mxu0
        %v1505 = vpop.f32.mrb[0].mxu0
        %v1506 = vadd.f32 %v1409, %v1505
        %v1507 = vpop.f32.mrb[0].mxu0
        %1508 = vmatprep.mubr.bf16.mxu0 %v1102
        %1509 = vmatmul.mubr.bf16.gmra.mrb[0].mxu0 %v1101
        %v1510 = vpop.f32.mrb[0].mxu0
        %v1511 = vadd.f32 %v1414, %v1510
        %v1512 = vpop.f32.mrb[0].mxu0
        %v1513 = vpop.f32.mrb[0].mxu0
        %v1514 = vadd.f32 %v1417, %v1513
        %v1515 = vpop.f32.mrb[0].mxu0
        %1516 = vmatprep.mubr.bf16.mxu0 %v1106
        %1517 = vmatmul.mubr.bf16.gmra.mrb[0].mxu0 %v1105
        %v1518 = vpop.f32.mrb[0].mxu0
        %v1519 = vadd.f32 %v1422, %v1518
        %v1520 = vpop.f32.mrb[0].mxu0
        %v1521 = vpop.f32.mrb[0].mxu0
        %v1522 = vadd.f32 %v1425, %v1521
        %v1523 = vpop.f32.mrb[0].mxu0
        %1524 = vdwg.mxu0
        %v1525 = vmax.f32 %v1463, 0.0
        %v1526 = vmax.f32 %v1466, 0.0
        %v1527 = vmax.f32 %v1471, 0.0
        %v1528 = vmax.f32 %v1474, 0.0
        %v1529 = vmax.f32 %v1479, 0.0
        %v1530 = vmax.f32 %v1482, 0.0
        %v1531 = vmax.f32 %v1487, 0.0
        %v1532 = vmax.f32 %v1490, 0.0
        %v1533 = vmax.f32 %v1495, 0.0
        %v1534 = vmax.f32 %v1498, 0.0
        %v1535 = vmax.f32 %v1503, 0.0
        %v1536 = vmax.f32 %v1506, 0.0
        %v1537 = vmax.f32 %v1511, 0.0
        %v1538 = vmax.f32 %v1514, 0.0
        %v1539 = vmax.f32 %v1519, 0.0
        %v1540 = vmax.f32 %v1522, 0.0
        %v1541 = vpack.c.bf16 %v1526, %v1525
        %v1542 = vpack.c.bf16 %v1528, %v1527
        %v1543 = vpack.c.bf16 %v1530, %v1529
        %v1544 = vpack.c.bf16 %v1532, %v1531
        %v1545 = vpack.c.bf16 %v1534, %v1533
        %v1546 = vpack.c.bf16 %v1536, %v1535
        %v1547 = vpack.c.bf16 %v1538, %v1537
        %v1548 = vpack.c.bf16 %v1540, %v1539
        %v1550 = vlaneseq
        %v1551 = vshrl.u32 %v1550, 7
        %v1552 = vsub.s32 0, %v1551
        %v1553 = vrot.slane %v536, %v1552
        %v1571 = vunpack.c.l.b16 %v519
        %v1572 = vunpack.c.l.b16 %v520
        %v1573 = vunpack.c.l.b16 %v521
        %v1574 = vunpack.c.l.b16 %v522
        %v1575 = vunpack.c.l.b16 %v523
        %v1576 = vunpack.c.l.b16 %v524
        %v1577 = vunpack.c.l.b16 %v525
        %v1578 = vunpack.c.l.b16 %v526
        %v1579 = vunpack.c.l.b16 %v527
        %v1580 = vunpack.c.l.b16 %v528
        %v1581 = vunpack.c.l.b16 %v529
        %v1582 = vunpack.c.l.b16 %v530
        %v1583 = vunpack.c.l.b16 %v531
        %v1584 = vunpack.c.l.b16 %v532
        %v1585 = vunpack.c.l.b16 %v533
        %v1586 = vunpack.c.l.b16 %v534
        %v1587 = vpack.c.b16 %v1572, %v1571
        %v1588 = vpack.c.b16 %v1574, %v1573
        %v1589 = vpack.c.b16 %v1576, %v1575
        %v1590 = vpack.c.b16 %v1578, %v1577
        %v1591 = vpack.c.b16 %v1580, %v1579
        %v1592 = vpack.c.b16 %v1582, %v1581
        %v1593 = vpack.c.b16 %v1584, %v1583
        %v1594 = vpack.c.b16 %v1586, %v1585
        %1603 = vmatprep.subr.bf16.mxu0 0
        %1604 = vmatpush1.bf16.msra.mxu0 %v1587
        %1605 = vmatprep.subr.bf16.mxu0 0
        %1606 = vmatpush1.bf16.msra.mxu0 %v1588
        %1607 = vmatprep.subr.bf16.mxu0 0
        %1608 = vmatpush1.bf16.msra.mxu0 %v1589
        %1609 = vmatprep.subr.bf16.mxu0 0
        %1610 = vmatpush1.bf16.msra.mxu0 %v1590
        %1611 = vmatprep.subr.bf16.mxu0 0
        %1612 = vmatpush1.bf16.msra.mxu0 %v1591
        %1613 = vmatprep.subr.bf16.mxu0 0
        %1614 = vmatpush1.bf16.msra.mxu0 %v1592
        %1615 = vmatprep.subr.bf16.mxu0 0
        %1616 = vmatpush1.bf16.msra.mxu0 %v1593
        %1617 = vmatprep.subr.bf16.mxu0 0
        %1618 = vmatpush1.bf16.msra.mxu0 %v1594
        %1619 = vmatprep.subr.bf16.mxu0 0
        %1620 = vmatpush1.bf16.msra.mxu0 0
        %1621 = vmatprep.subr.bf16.mxu0 0
        %1622 = vmatpush1.bf16.msra.mxu0 0
        %1623 = vmatprep.subr.bf16.mxu0 0
        %1624 = vmatpush1.bf16.msra.mxu0 0
        %1625 = vmatprep.subr.bf16.mxu0 0
        %1626 = vmatpush1.bf16.msra.mxu0 0
        %1627 = vmatprep.subr.bf16.mxu0 0
        %1628 = vmatpush1.bf16.msra.mxu0 0
        %1629 = vmatprep.subr.bf16.mxu0 0
        %1630 = vmatpush1.bf16.msra.mxu0 0
        %1631 = vmatprep.subr.bf16.mxu0 0
        %1632 = vmatpush1.bf16.msra.mxu0 0
        %1633 = vmatprep.subr.bf16.mxu0 0
        %1634 = vmatpush1.bf16.msra.mxu0 0
        %1635 = vmatprep.mubr.bf16.mxu0 0
        %1636 = vmatmul.mubr.bf16.gmra.mrb[0].mxu0 %v1541
        %v1637 = vpop.f32.mrb[0].mxu0
        %v1638 = vadd.f32 %v1553, %v1637
        %v1639 = vpop.f32.mrb[0].mxu0
        %v1640 = vpop.f32.mrb[0].mxu0
        %v1641 = vadd.f32 %v1553, %v1640
        %v1642 = vpop.f32.mrb[0].mxu0
        %1643 = vmatprep.mubr.bf16.mxu0 0
        %1644 = vmatmul.mubr.bf16.gmra.mrb[0].mxu0 %v1542
        %v1645 = vpop.f32.mrb[0].mxu0
        %v1646 = vadd.f32 %v1553, %v1645
        %v1647 = vpop.f32.mrb[0].mxu0
        %v1648 = vpop.f32.mrb[0].mxu0
        %v1649 = vadd.f32 %v1553, %v1648
        %v1650 = vpop.f32.mrb[0].mxu0
        %1651 = vmatprep.mubr.bf16.mxu0 0
        %1652 = vmatmul.mubr.bf16.gmra.mrb[0].mxu0 %v1543
        %v1653 = vpop.f32.mrb[0].mxu0
        %v1654 = vadd.f32 %v1553, %v1653
        %v1655 = vpop.f32.mrb[0].mxu0
        %v1656 = vpop.f32.mrb[0].mxu0
        %v1657 = vadd.f32 %v1553, %v1656
        %v1658 = vpop.f32.mrb[0].mxu0
        %1659 = vmatprep.mubr.bf16.mxu0 0
        %1660 = vmatmul.mubr.bf16.gmra.mrb[0].mxu0 %v1544
        %v1661 = vpop.f32.mrb[0].mxu0
        %v1662 = vadd.f32 %v1553, %v1661
        %v1663 = vpop.f32.mrb[0].mxu0
        %v1664 = vpop.f32.mrb[0].mxu0
        %v1665 = vadd.f32 %v1553, %v1664
        %v1666 = vpop.f32.mrb[0].mxu0
        %1667 = vmatprep.mubr.bf16.mxu0 0
        %1668 = vmatmul.mubr.bf16.gmra.mrb[0].mxu0 %v1545
        %v1669 = vpop.f32.mrb[0].mxu0
        %v1670 = vadd.f32 %v1553, %v1669
        %v1671 = vpop.f32.mrb[0].mxu0
        %v1672 = vpop.f32.mrb[0].mxu0
        %v1673 = vadd.f32 %v1553, %v1672
        %v1674 = vpop.f32.mrb[0].mxu0
        %1675 = vmatprep.mubr.bf16.mxu0 0
        %1676 = vmatmul.mubr.bf16.gmra.mrb[0].mxu0 %v1546
        %v1677 = vpop.f32.mrb[0].mxu0
        %v1678 = vadd.f32 %v1553, %v1677
        %v1679 = vpop.f32.mrb[0].mxu0
        %v1680 = vpop.f32.mrb[0].mxu0
        %v1681 = vadd.f32 %v1553, %v1680
        %v1682 = vpop.f32.mrb[0].mxu0
        %1683 = vmatprep.mubr.bf16.mxu0 0
        %1684 = vmatmul.mubr.bf16.gmra.mrb[0].mxu0 %v1547
        %v1685 = vpop.f32.mrb[0].mxu0
        %v1686 = vadd.f32 %v1553, %v1685
        %v1687 = vpop.f32.mrb[0].mxu0
        %v1688 = vpop.f32.mrb[0].mxu0
        %v1689 = vadd.f32 %v1553, %v1688
        %v1690 = vpop.f32.mrb[0].mxu0
        %1691 = vmatprep.mubr.bf16.mxu0 0
        %1692 = vmatmul.mubr.bf16.gmra.mrb[0].mxu0 %v1548
        %v1693 = vpop.f32.mrb[0].mxu0
        %v1694 = vadd.f32 %v1553, %v1693
        %v1695 = vpop.f32.mrb[0].mxu0
        %v1696 = vpop.f32.mrb[0].mxu0
        %v1697 = vadd.f32 %v1553, %v1696
        %v1698 = vpop.f32.mrb[0].mxu0
        %1699 = vdwg.mxu0
        %v1700 = vtanh.pop %v1638
        %v1701 = vtanh.pop %v1641
        %v1702 = vtanh.pop %v1646
        %v1703 = vtanh.pop %v1649
        %v1704 = vtanh.pop %v1654
        %v1705 = vtanh.pop %v1657
        %v1706 = vtanh.pop %v1662
        %v1707 = vtanh.pop %v1665
        %v1708 = vtanh.pop %v1670
        %v1709 = vtanh.pop %v1673
        %v1710 = vtanh.pop %v1678
        %v1711 = vtanh.pop %v1681
        %v1712 = vtanh.pop %v1686
        %v1713 = vtanh.pop %v1689
        %v1714 = vtanh.pop %v1694
        %v1715 = vtanh.pop %v1697
        %v1716 = vld [vmem:[#allocation2] sm:$0xff]
        %v1717 = vpack.c.bf16 %v1716, %v1716
        %v1718 = vpack.c.bf16 %v1701, %v1700
        %v1719 = vpack.c.bf16 %v1703, %v1702
        %v1720 = vpack.c.bf16 %v1705, %v1704
        %v1721 = vpack.c.bf16 %v1707, %v1706
        %v1722 = vpack.c.bf16 %v1709, %v1708
        %v1723 = vpack.c.bf16 %v1711, %v1710
        %v1724 = vpack.c.bf16 %v1713, %v1712
        %v1725 = vpack.c.bf16 %v1715, %v1714
        %1726 = vmatprep.subr.bf16.mxu0 0
        %1727 = vmatpush1.bf16.xpose.msra.mxu0 %v1718
        %1728 = vmatprep.subr.bf16.mxu0 0
        %1729 = vmatpush1.bf16.xpose.msra.mxu0 %v1719
        %1730 = vmatprep.subr.bf16.mxu0 0
        %1731 = vmatpush1.bf16.xpose.msra.mxu0 %v1720
        %1732 = vmatprep.subr.bf16.mxu0 0
        %1733 = vmatpush1.bf16.xpose.msra.mxu0 %v1721
        %1734 = vmatprep.subr.bf16.mxu0 0
        %1735 = vmatpush1.bf16.xpose.msra.mxu0 %v1722
        %1736 = vmatprep.subr.bf16.mxu0 0
        %1737 = vmatpush1.bf16.xpose.msra.mxu0 %v1723
        %1738 = vmatprep.subr.bf16.mxu0 0
        %1739 = vmatpush1.bf16.xpose.msra.mxu0 %v1724
        %1740 = vmatprep.subr.bf16.mxu0 0
        %1741 = vmatpush1.bf16.xpose.msra.mxu0 %v1725
        %1742 = vmatprep.subr.bf16.mxu0 0
        %1743 = vmatpush1.bf16.xpose.msra.mxu0 0
        %1744 = vmatprep.subr.bf16.mxu0 0
        %1745 = vmatpush1.bf16.xpose.msra.mxu0 0
        %1746 = vmatprep.subr.bf16.mxu0 0
        %1747 = vmatpush1.bf16.xpose.msra.mxu0 0
        %1748 = vmatprep.subr.bf16.mxu0 0
        %1749 = vmatpush1.bf16.xpose.msra.mxu0 0
        %1750 = vmatprep.subr.bf16.mxu0 0
        %1751 = vmatpush1.bf16.xpose.msra.mxu0 0
        %1752 = vmatprep.subr.bf16.mxu0 0
        %1753 = vmatpush1.bf16.xpose.msra.mxu0 0
        %1754 = vmatprep.subr.bf16.mxu0 0
        %1755 = vmatpush1.bf16.xpose.msra.mxu0 0
        %1756 = vmatprep.subr.bf16.mxu0 0
        %1757 = vmatpush1.bf16.xpose.msra.mxu0 0
        %1758 = vmatprep.mubr.bf16.mxu0 0
        %1759 = vmatmul.mubr.bf16.gmra.mrb[0].mxu0 %v1717
        %v1760 = vpop.f32.mrb[0].mxu0
        %v1761 = vadd.f32 0.0, %v1760
        %v1762 = vpop.f32.mrb[0].mxu0
        %v1763 = vpop.f32.mrb[0].mxu0
        %v1764 = vpop.f32.mrb[0].mxu0
        %1765 = vdwg.mxu0
        %s1766 = smul.u32 %s38, 3
        %s1767 = sadd.s32 %s1766, %s39
        %v1768 = vlaneseq
        %v1769 = vand.u32 %v1768, 127
        %s1770 = smul.u32 %s1767, 128
        %v1771 = vstv %s1770
        %v1772 = vadd.s32 %v1769, %v1771
        %s1773 = sld [smem:[#allocation4]]
        %v1774 = vstv %s1773
        %vm1775 = vcmp.lt.s32.totalorder %v1772, %v1774
        %v1776 = vsel %vm1775, 1, 0
        %vm1777 = vcmp.eq.s32.totalorder %v1776, 1
        %v1778 = vsel %vm1777, %v1761, -1e+30
        %1779 = vst [vmem:[%s421] sm:$0xff] %v1778
        %v1780 = vld [vmem:[%s449] sm:$0xff]
        %1781 = vmax.xlane.f32.xlu0 %v1778
        %v1782 = vpop.xlane.xlu0 %1781
        %v1783 = vmax.f32 %v1780, %v1782
        %v1784 = vsub.f32 %v1780, %v1783
        %v1785 = vmul.f32 %v1784, 1.442695
        %v1786 = vpow.pop %v1785
        %1788 = vset.pattern.permute.xlu0 0
        %1789 = vperm.xlu0 %1788, %v1783
        %v1790 = vpop.permute.xlu0 %1789
        %v1792 = vsub.f32 %v1778, %v1790
        %v1793 = vmul.f32 %v1792, 1.442695
        %v1794 = vpow.pop %v1793
        %v1795 = vld [vmem:[%s453] sm:$0xff]
        %v1796 = vmul.f32 %v1786, %v1795
        %1797 = vadd.xlane.f32.xlu0 %v1794
        %v1798 = vpop.xlane.xlu0 %1797
        %v1799 = vadd.f32 %v1796, %v1798
        %vm1800 = vcmask 7168
        %1801 = vst.msk [vmem:[%s453] sm:$0xff] %vm1800, %v1799
        %v1802 = vld [vmem:[%s428] sm:$0xff]
        %v1803 = vld [vmem:[%s428 + $0x8] sm:$0xff]
        %v1804 = vld [vmem:[%s428 + $0x10] sm:$0xff]
        %v1805 = vld [vmem:[%s428 + $0x18] sm:$0xff]
        %1807 = vset.pattern.permute.xlu0 0
        %1808 = vperm.xlu0 %1807, %v1786
        %v1809 = vpop.permute.xlu0 %1808
        %v1811 = vmul.f32 %v1809, %v1802
        %v1812 = vmul.f32 %v1809, %v1803
        %v1813 = vmul.f32 %v1809, %v1804
        %v1814 = vmul.f32 %v1809, %v1805
        %v1815 = vpack.c.bf16 %v1794, %v1794
        %1816 = vmatprep.subr.bf16.mxu0 %v1076
        %1817 = vmatpush1.bf16.msra.mxu0 %v1075
        %1818 = vmatprep.subr.bf16.mxu0 %v1080
        %1819 = vmatpush1.bf16.msra.mxu0 %v1079
        %1820 = vmatprep.subr.bf16.mxu0 %v1084
        %1821 = vmatpush1.bf16.msra.mxu0 %v1083
        %1822 = vmatprep.subr.bf16.mxu0 %v1088
        %1823 = vmatpush1.bf16.msra.mxu0 %v1087
        %1824 = vmatprep.subr.bf16.mxu0 %v1092
        %1825 = vmatpush1.bf16.msra.mxu0 %v1091
        %1826 = vmatprep.subr.bf16.mxu0 %v1096
        %1827 = vmatpush1.bf16.msra.mxu0 %v1095
        %1828 = vmatprep.subr.bf16.mxu0 %v1100
        %1829 = vmatpush1.bf16.msra.mxu0 %v1099
        %1830 = vmatprep.subr.bf16.mxu0 %v1104
        %1831 = vmatpush1.bf16.msra.mxu0 %v1103
        %1832 = vmatprep.subr.bf16.mxu0 0
        %1833 = vmatpush1.bf16.msra.mxu0 0
        %1834 = vmatprep.subr.bf16.mxu0 0
        %1835 = vmatpush1.bf16.msra.mxu0 0
        %1836 = vmatprep.subr.bf16.mxu0 0
        %1837 = vmatpush1.bf16.msra.mxu0 0
        %1838 = vmatprep.subr.bf16.mxu0 0
        %1839 = vmatpush1.bf16.msra.mxu0 0
        %1840 = vmatprep.subr.bf16.mxu0 0
        %1841 = vmatpush1.bf16.msra.mxu0 0
        %1842 = vmatprep.subr.bf16.mxu0 0
        %1843 = vmatpush1.bf16.msra.mxu0 0
        %1844 = vmatprep.subr.bf16.mxu0 0
        %1845 = vmatpush1.bf16.msra.mxu0 0
        %1846 = vmatprep.subr.bf16.mxu0 0
        %1847 = vmatpush1.bf16.msra.mxu0 0
        %1848 = vmatprep.mubr.bf16.mxu0 0
        %1849 = vmatmul.mubr.bf16.gmra.mrb[0].mxu0 %v1815
        %v1850 = vpop.f32.mrb[0].mxu0
        %v1851 = vadd.f32 0.0, %v1850
        %v1852 = vpop.f32.mrb[0].mxu0
        %v1853 = vadd.f32 0.0, %v1852
        %v1854 = vpop.f32.mrb[0].mxu0
        %v1855 = vpop.f32.mrb[0].mxu0
        %1856 = vdwg.mxu0
        %1857 = vmatprep.subr.bf16.mxu0 %v1078
        %1858 = vmatpush1.bf16.msra.mxu0 %v1077
        %1859 = vmatprep.subr.bf16.mxu0 %v1082
        %1860 = vmatpush1.bf16.msra.mxu0 %v1081
        %1861 = vmatprep.subr.bf16.mxu0 %v1086
        %1862 = vmatpush1.bf16.msra.mxu0 %v1085
        %1863 = vmatprep.subr.bf16.mxu0 %v1090
        %1864 = vmatpush1.bf16.msra.mxu0 %v1089
        %1865 = vmatprep.subr.bf16.mxu0 %v1094
        %1866 = vmatpush1.bf16.msra.mxu0 %v1093
        %1867 = vmatprep.subr.bf16.mxu0 %v1098
        %1868 = vmatpush1.bf16.msra.mxu0 %v1097
        %1869 = vmatprep.subr.bf16.mxu0 %v1102
        %1870 = vmatpush1.bf16.msra.mxu0 %v1101
        %1871 = vmatprep.subr.bf16.mxu0 %v1106
        %1872 = vmatpush1.bf16.msra.mxu0 %v1105
        %1873 = vmatprep.subr.bf16.mxu0 0
        %1874 = vmatpush1.bf16.msra.mxu0 0
        %1875 = vmatprep.subr.bf16.mxu0 0
        %1876 = vmatpush1.bf16.msra.mxu0 0
        %1877 = vmatprep.subr.bf16.mxu0 0
        %1878 = vmatpush1.bf16.msra.mxu0 0
        %1879 = vmatprep.subr.bf16.mxu0 0
        %1880 = vmatpush1.bf16.msra.mxu0 0
        %1881 = vmatprep.subr.bf16.mxu0 0
        %1882 = vmatpush1.bf16.msra.mxu0 0
        %1883 = vmatprep.subr.bf16.mxu0 0
        %1884 = vmatpush1.bf16.msra.mxu0 0
        %1885 = vmatprep.subr.bf16.mxu0 0
        %1886 = vmatpush1.bf16.msra.mxu0 0
        %1887 = vmatprep.subr.bf16.mxu0 0
        %1888 = vmatpush1.bf16.msra.mxu0 0
        %1889 = vmatprep.mubr.bf16.mxu0 0
        %1890 = vmatmul.mubr.bf16.gmra.mrb[0].mxu0 %v1815
        %v1891 = vpop.f32.mrb[0].mxu0
        %v1892 = vadd.f32 0.0, %v1891
        %v1893 = vpop.f32.mrb[0].mxu0
        %v1894 = vadd.f32 0.0, %v1893
        %v1895 = vpop.f32.mrb[0].mxu0
        %v1896 = vpop.f32.mrb[0].mxu0
        %1897 = vdwg.mxu0
        %v1898 = vadd.f32 %v1811, %v1851
        %v1899 = vadd.f32 %v1812, %v1853
        %v1900 = vadd.f32 %v1813, %v1892
        %v1901 = vadd.f32 %v1814, %v1894
        %1902 = vst [vmem:[%s428] sm:$0xff] %v1898
        %1903 = vst [vmem:[%s428 + $0x8] sm:$0xff] %v1899
        %1904 = vst [vmem:[%s428 + $0x10] sm:$0xff] %v1900
        %1905 = vst [vmem:[%s428 + $0x18] sm:$0xff] %v1901
        %1906 = vst.msk [vmem:[%s449] sm:$0xff] %vm1800, %v1783
        %s1907 = sand.u32 %s193, 1
        %s1908 = scalar_lea.sflag [#allocation7], %s1907
        %s1909 = sand.u32 %s193, 1
        %s1910 = smul.addr %s1909, 8
        %s1911 = scalar_lea.vmem [#allocation13], %s1910
        %s1912 = sand.u32 %s219, 1
        %s1913 = scalar_lea.sflag [#allocation15], %s1912
        %s1914 = sand.u32 %s219, 1
        %s1915 = smul.addr %s1914, 32
        %s1916 = scalar_lea.vmem [#allocation14], %s1915
        %p1917 = scmp.lt.s32.totalorder %s38, 1
        %s1918 = scalar_select %p1917, %s38, 1
        %s1919 = smul.addr %s1918, 8
        %s1920 = scalar_lea.vmem %s9, %s1919
        %p1921 = scmp.lt.s32.totalorder %s38, 1
        %s1922 = scalar_select %p1921, %s38, 1
        %s1923 = smul.addr %s1922, 8
        %s1924 = scalar_lea.vmem %s10, %s1923
        // Predicated region
        $region65: #{tpu_custom_call.1} parent=43 // pred_check
          %p1925 = pneg %p203
        $region66: #{tpu_custom_call.1} parent=43 // pred_check_branch
          %1927 = sbr.rel (%p1925) target = $region68
        $region67: #{tpu_custom_call.1} parent=43 // pred_region
          %s1928 = smul.u32 %s38, 3
          %s1929 = sadd.s32 %s1928, %s39
          %s1931 = ssub.s32 128, 128
          %1932 = vsyncadd %s1908, %s1931
          %s1933 = smul.addr %s1929, 128
          %s1934 = scalar_lea.hbm %s7, %s1933
          %s1936 = sshll.u32 %s1911, 4
          %s1937 = int_to_ptr.vmem [resolvable:$true] %s1936
          %1939 = dma.vmem_to_hbm [thread:$0]  %s1937, 128, %s1934, %s1908
        $region68: #{tpu_custom_call.1} parent=43 // pred_fallthru
          _
        // Predicated region
        $region69: #{tpu_custom_call.1} parent=43 // pred_check
          %p1940 = pneg %p229
        $region70: #{tpu_custom_call.1} parent=43 // pred_check_branch
          %1942 = sbr.rel (%p1940) target = $region72
        $region71: #{tpu_custom_call.1} parent=43 // pred_region
          %s1944 = ssub.s32 512, 512
          %1945 = vsyncadd %s1913, %s1944
          %s1946 = smul.addr %s38, 4
          %s1947 = smul.addr %s1946, 128
          %s1948 = scalar_lea.hbm %s8, %s1947
          %s1950 = sshll.u32 %s1916, 4
          %s1951 = int_to_ptr.vmem [resolvable:$true] %s1950
          %1953 = dma.vmem_to_hbm [thread:$0]  %s1951, 512, %s1948, %s1913
        $region72: #{tpu_custom_call.1} parent=43 // pred_fallthru
          _
        // Predicated region
        $region73: #{tpu_custom_call.1} parent=43 // pred_check
          %p1954 = pneg %p255
        $region74: #{tpu_custom_call.1} parent=43 // pred_check_branch
          %1956 = sbr.rel (%p1954) target = $region76
        $region75: #{tpu_custom_call.1} parent=43 // pred_region
          _
        $region76: #{tpu_custom_call.1} parent=43 // pred_fallthru
          _
        // Predicated region
        $region77: #{tpu_custom_call.1} parent=43 // pred_check
          %p1957 = pneg %p281
        $region78: #{tpu_custom_call.1} parent=43 // pred_check_branch
          %1959 = sbr.rel (%p1957) target = $region80
        $region79: #{tpu_custom_call.1} parent=43 // pred_region
          _
        $region80: #{tpu_custom_call.1} parent=43 // pred_fallthru
          _
      $region44: #{tpu_custom_call.1} parent=5 // pred_fallthru
        _
      %p1960 = scmp.le.s32.totalorder 2, %s29
      // Predicated region
      $region81: #{tpu_custom_call.1} parent=5 // pred_check
        %p1961 = pneg %p1960
      $region82: #{tpu_custom_call.1} parent=5 // pred_check_branch
        %1963 = sbr.rel (%p1961) target = $region84
      $region83: #{tpu_custom_call.1} parent=5 // pred_region
        %s1964 = ssub.s32 %s29, 2
        // Predicated region
        $region85: #{tpu_custom_call.1} parent=83 // pred_check
          %p1965 = pneg %p209
        $region86: #{tpu_custom_call.1} parent=83 // pred_check_branch
          %1967 = sbr.rel (%p1965) target = $region88
        $region87: #{tpu_custom_call.1} parent=83 // pred_region
          %s1968 = sand.u32 %s194, 1
          %s1969 = scalar_lea.sflag [#allocation7], %s1968
          %s1970 = sand.u32 %s194, 1
          %s1971 = smul.addr %s1970, 8
          %s1972 = scalar_lea.vmem [#allocation13], %s1971
          %1973 = dma.done %s1969, 128
        $region88: #{tpu_custom_call.1} parent=83 // pred_fallthru
          _
        // Predicated region
        $region89: #{tpu_custom_call.1} parent=83 // pred_check
          %p1974 = pneg %p235
        $region90: #{tpu_custom_call.1} parent=83 // pred_check_branch
          %1976 = sbr.rel (%p1974) target = $region92
        $region91: #{tpu_custom_call.1} parent=83 // pred_region
          %s1977 = sand.u32 %s220, 1
          %s1978 = scalar_lea.sflag [#allocation15], %s1977
          %s1979 = sand.u32 %s220, 1
          %s1980 = smul.addr %s1979, 32
          %s1981 = scalar_lea.vmem [#allocation14], %s1980
          %1982 = dma.done %s1978, 512
        $region92: #{tpu_custom_call.1} parent=83 // pred_fallthru
          _
        // Predicated region
        $region93: #{tpu_custom_call.1} parent=83 // pred_check
          %p1983 = pneg %p261
        $region94: #{tpu_custom_call.1} parent=83 // pred_check_branch
          %1985 = sbr.rel (%p1983) target = $region96
        $region95: #{tpu_custom_call.1} parent=83 // pred_region
          %p1986 = scmp.lt.s32.totalorder %s40, 1
          %s1987 = scalar_select %p1986, %s40, 1
          %s1988 = smul.addr %s1987, 8
          %s1989 = scalar_lea.vmem %s9, %s1988
        $region96: #{tpu_custom_call.1} parent=83 // pred_fallthru
          _
        // Predicated region
        $region97: #{tpu_custom_call.1} parent=83 // pred_check
          %p1990 = pneg %p287
        $region98: #{tpu_custom_call.1} parent=83 // pred_check_branch
          %1992 = sbr.rel (%p1990) target = $region100
        $region99: #{tpu_custom_call.1} parent=83 // pred_region
          %p1993 = scmp.lt.s32.totalorder %s40, 1
          %s1994 = scalar_select %p1993, %s40, 1
          %s1995 = smul.addr %s1994, 8
          %s1996 = scalar_lea.vmem %s10, %s1995
        $region100: #{tpu_custom_call.1} parent=83 // pred_fallthru
          _
      $region84: #{tpu_custom_call.1} parent=5 // pred_fallthru
        _
    $region6: #{tpu_custom_call.1} parent=1 // loop_footer
      %s33 = sadd.s32 1, %s29
    $region7: #{tpu_custom_call.1} parent=1 // loop_footer_branch
      %28 = sbr.rel target = $region3
    $region8: #{tpu_custom_call.1} parent=1 // loop_exit
      _
    %1997 = vsyncpa [#allocation6], 1
    %s1998 = scalar_lea.sflag [#allocation6], 1
    %1999 = vsyncpa %s1998, 1
    %2000 = vsyncpa [#allocation9], 1
    %2001 = vsyncpa [#allocation12], 1
    %2002 = vsyncpa [#allocation7], 1
    %s2003 = scalar_lea.sflag [#allocation7], 1
    %2004 = vsyncpa %s2003, 1
    %2005 = vsyncpa [#allocation15], 1
    %s2006 = scalar_lea.sflag [#allocation15], 1
    %2007 = vsyncpa %s2006, 1

</llo_original>
